<compile_context>
chip_gen: v5e
topology: v5e:2x2
jax: 0.10.0
libtpu: 0.0.40
codegen_flags: <defaults>
</compile_context>

<pallas_src>
import jax
import jax.numpy as jnp
from jax import lax
from jax.experimental import pallas as pl
from jax.experimental.pallas import tpu as pltpu


def _round_up(x: int, m: int) -> int:
    return ((x + m - 1) // m) * m


def _sublane_pack(dtype) -> int:
    # Sublane packing factor: rows per vreg for the second-to-last dim.
    return {4: 8, 2: 16, 1: 32}.get(jnp.dtype(dtype).itemsize, 8)


def _make_kernel(use_acc: bool, k_rem: int, tk: int):
    """Build the matmul kernel.

    use_acc: accumulate in an f32 scratch and cast at the end (non-f32 output).
    k_rem:   K % tk (static). If nonzero, the last k block is partial and its
             tail (unspecified values from the clipped DMA) is masked to zero.
    """

    def partial_product(a_ref, b_ref):
        a = a_ref[...]
        b = b_ref[...]
        if k_rem:
            is_last = pl.program_id(2) == pl.num_programs(2) - 1
            limit = jnp.where(is_last, k_rem, tk)
            a_col = lax.broadcasted_iota(jnp.int32, a.shape, 1)
            b_row = lax.broadcasted_iota(jnp.int32, b.shape, 0)
            a = jnp.where(a_col < limit, a, jnp.zeros_like(a))
            b = jnp.where(b_row < limit, b, jnp.zeros_like(b))
        return jnp.dot(a, b, preferred_element_type=jnp.float32)

    if not use_acc:
        # f32 output: accumulate directly into the resident output tile.
        def kernel(a_ref, b_ref, o_ref):
            p = partial_product(a_ref, b_ref)

            @pl.when(pl.program_id(2) == 0)
            def _():
                o_ref[...] = p            # first partial: write, no zero+add

            @pl.when(pl.program_id(2) != 0)
            def _():
                o_ref[...] += p

        return kernel

    def kernel(a_ref, b_ref, o_ref, acc_ref):
        p = partial_product(a_ref, b_ref)

        @pl.when(pl.program_id(2) == 0)
        def _():
            acc_ref[...] = p

        @pl.when(pl.program_id(2) != 0)
        def _():
            acc_ref[...] += p

        @pl.when(pl.program_id(2) == pl.num_programs(2) - 1)
        def _():
            o_ref[...] = acc_ref[...].astype(o_ref.dtype)

    return kernel


def _pick_tk(K: int, tk_target: int) -> int:
    """Largest clean reduction tile: full K, the target, or a 128-multiple
    divisor of K.  Falls back to the target (kernel masks the tail)."""
    if K <= tk_target:
        return K
    if K % tk_target == 0:
        return tk_target
    d = (tk_target // 128) * 128
    while d >= 128:
        if K % d == 0:
            return d
        d -= 128
    return tk_target  # ragged tail -> in-kernel masking


def _choose_tiles(M: int, K: int, N: int, a_dtype):
    pack = _sublane_pack(a_dtype)
    if M >= 2048 and N >= 2048:
        # Large problems: 1024-class output tiles halve redundant A/B streaming.
        tm_t, tn_t, tk_t = 1024, 1024, 1024
    else:
        tm_t, tn_t, tk_t = 512, 512, 2048

    tm = M if M <= tm_t else tm_t          # block == full dim is always legal
    tn = N if N <= tn_t else tn_t
    tk = _pick_tk(K, tk_t)

    # If the whole problem is a single (i, j) tile, split one parallel axis so
    # v7x's second TensorCore gets work (harmless on single-core chips).
    if pl.cdiv(M, tm) == 1 and pl.cdiv(N, tn) == 1:
        if tn >= 256:
            tn = _round_up(pl.cdiv(N, 2), 128)
        elif tm >= 2 * pack:
            tm = _round_up(pl.cdiv(M, 2), pack)
    return tm, tn, tk


def _vmem_limit_bytes(vmem_needed: int) -> int:
    try:
        phys = int(pltpu.get_tpu_info().vmem_capacity_bytes)
        cap = max(phys - 8 * 1024 * 1024, 16 * 1024 * 1024)
    except Exception:
        cap = 56 * 1024 * 1024  # safe on every generation (v7x has 64 MiB/TC)
    return int(min(max(vmem_needed * 3 // 2, 32 * 1024 * 1024), cap))


def matmul(a: jax.Array, b: jax.Array, *, tm: int | None = None,
           tn: int | None = None, tk: int | None = None,
           cast_inputs_to_bf16: bool = False) -> jax.Array:
    assert a.ndim == 2 and b.ndim == 2, "matmul expects 2-D operands"
    M, K = a.shape
    K2, N = b.shape
    assert K == K2, "inner dimensions must match"
    assert jnp.issubdtype(a.dtype, jnp.floating) and \
        jnp.issubdtype(b.dtype, jnp.floating), \
        "float matmul only (v7x MXU has no integer path)"

    out_dtype = jnp.result_type(a.dtype, b.dtype)

    if cast_inputs_to_bf16:
        # Optional (changes numerics): native-bf16 MXU, f32 accumulation kept.
        a = a.astype(jnp.bfloat16)
        b = b.astype(jnp.bfloat16)

    atm, atn, atk = _choose_tiles(M, K, N, a.dtype)
    tm = atm if tm is None else tm
    tn = atn if tn is None else tn
    tk = atk if tk is None else tk

    grid = (pl.cdiv(M, tm), pl.cdiv(N, tn), pl.cdiv(K, tk))
    k_rem = K % tk

    use_direct = out_dtype == jnp.float32
    kernel = _make_kernel(not use_direct, k_rem, tk)
    scratch = [] if use_direct else [pltpu.VMEM((tm, tn), jnp.float32)]

    a_sz = jnp.dtype(a.dtype).itemsize
    b_sz = jnp.dtype(b.dtype).itemsize
    o_sz = jnp.dtype(out_dtype).itemsize

    vmem_needed = (2 * tm * tk * a_sz          # double-buffered A blocks
                   + 2 * tk * tn * b_sz        # double-buffered B blocks
                   + 2 * tm * tn * o_sz        # double-buffered output blocks
                   + (0 if use_direct else tm * tn * 4))
    if k_rem:
        # Masked operands are materialized once more in VMEM.
        vmem_needed += tm * tk * a_sz + tk * tn * b_sz

    cost = pl.CostEstimate(
        flops=2 * M * N * K,
        transcendentals=0,
        bytes_accessed=M * K * a_sz + K * N * b_sz + M * N * o_sz,
    )

    return pl.pallas_call(
        kernel,
        out_shape=jax.ShapeDtypeStruct((M, N), out_dtype),
        grid_spec=pltpu.PrefetchScalarGridSpec(
            num_scalar_prefetch=0,
            grid=grid,
            in_specs=[
                pl.BlockSpec((tm, tk), lambda i, j, k: (i, k)),
                pl.BlockSpec((tk, tn), lambda i, j, k: (k, j)),
            ],
            out_specs=pl.BlockSpec((tm, tn), lambda i, j, k: (i, j)),
            scratch_shapes=scratch,
        ),
        compiler_params=pltpu.CompilerParams(
            dimension_semantics=("parallel", "parallel", "arbitrary"),
            vmem_limit_bytes=_vmem_limit_bytes(vmem_needed),
        ),
        cost_estimate=cost,
    )(a, b)


if __name__ == "__main__":
    key = jax.random.PRNGKey(0)
    k_a, k_b, k_c, k_d = jax.random.split(key, 4)

    # Case 1: tile-aligned small shapes (exercises the dual-core N split).
    M, K, N = 256, 512, 384
    A = jax.random.normal(k_a, (M, K), dtype=jnp.float32)
    B = jax.random.normal(k_b, (K, N), dtype=jnp.float32)
    C = matmul(A, B)
    jax.block_until_ready(C)
    C_ref = A @ B
    assert C.shape == (M, N)
    assert jnp.allclose(C, C_ref, atol=1e-4, rtol=1e-4), "mismatch (aligned)"

    # Case 2: unaligned shapes exercising the partial-block (no-pad) path.
    M2, K2, N2 = 200, 300, 260
    A2 = jax.random.normal(k_c, (M2, K2), dtype=jnp.float32)
    B2 = jax.random.normal(k_d, (K2, N2), dtype=jnp.float32)
    C2 = matmul(A2, B2)
    jax.block_until_ready(C2)
    C2_ref = A2 @ B2
    assert C2.shape == (M2, N2)
    assert jnp.allclose(C2, C2_ref, atol=1e-4, rtol=1e-4), "mismatch (unaligned)"

    print("KERNEL_OK")
</pallas_src>

<mosaic_0001>
module attributes {stable_mosaic.version = 11 : i64} {
  func.func @kernel(%arg0: i32, %arg1: i32, %arg2: i32, %arg3: memref<256x512xf32, #tpu.memory_space<vmem>>, %arg4: memref<512x256xf32, #tpu.memory_space<vmem>>, %arg5: memref<256x256xf32, #tpu.memory_space<vmem>>) attributes {dimension_semantics = [#tpu.dimension_semantics<parallel>, #tpu.dimension_semantics<parallel>, #tpu.dimension_semantics<arbitrary>], iteration_bounds = array<i64: 1, 2, 1>, scalar_prefetch = 0 : i64, scratch_operands = 0 : i64, tpu.core_type = #tpu.core_type<tc>, window_params = [{transform_indices = @transform_0, window_bounds = array<i64: 256, 512>}, {transform_indices = @transform_1, window_bounds = array<i64: 512, 256>}, {transform_indices = @transform_2, window_bounds = array<i64: 256, 256>}]} {
    %c0 = arith.constant 0 : index
    %c0_0 = arith.constant 0 : index
    %0 = vector.load %arg3[%c0, %c0_0] : memref<256x512xf32, #tpu.memory_space<vmem>>, vector<256x512xf32>
    %c0_1 = arith.constant 0 : index
    %c0_2 = arith.constant 0 : index
    %1 = vector.load %arg4[%c0_1, %c0_2] : memref<512x256xf32, #tpu.memory_space<vmem>>, vector<512x256xf32>
    %cst = arith.constant dense<0.000000e+00> : vector<256x256xf32>
    %2 = tpu.matmul %0, %1, %cst {dimension_numbers = #tpu.dot_dimension_numbers<[1], [0], [0], [1], [0, 0, 1, 1], [], []>} : vector<256x512xf32>, vector<512x256xf32>, vector<256x256xf32> -> vector<256x256xf32>
    %c0_i32 = arith.constant 0 : i32
    %3 = arith.cmpi eq, %arg2, %c0_i32 : i32
    %4 = arith.extui %3 : i1 to i32
    %c0_i32_3 = arith.constant 0 : i32
    %5 = arith.cmpi ne, %4, %c0_i32_3 : i32
    scf.if %5 {
      %c0_6 = arith.constant 0 : index
      %c0_7 = arith.constant 0 : index
      %9 = vector.load %arg5[%c0_6, %c0_7] : memref<256x256xf32, #tpu.memory_space<vmem>>, vector<256x256xf32>
      tpu.vector_store %arg5[%c0_6, %c0_7], %2 {strides = array<i32>} : memref<256x256xf32, #tpu.memory_space<vmem>>, vector<256x256xf32>,
    } else {
    }
    %c0_i32_4 = arith.constant 0 : i32
    %6 = arith.cmpi ne, %arg2, %c0_i32_4 : i32
    %7 = arith.extui %6 : i1 to i32
    %c0_i32_5 = arith.constant 0 : i32
    %8 = arith.cmpi ne, %7, %c0_i32_5 : i32
    scf.if %8 {
      %c0_6 = arith.constant 0 : index
      %c0_7 = arith.constant 0 : index
      %9 = vector.load %arg5[%c0_6, %c0_7] : memref<256x256xf32, #tpu.memory_space<vmem>>, vector<256x256xf32>
      %10 = arith.addf %9, %2 : vector<256x256xf32>
      %c0_8 = arith.constant 0 : index
      %c0_9 = arith.constant 0 : index
      %11 = vector.load %arg5[%c0_8, %c0_9] : memref<256x256xf32, #tpu.memory_space<vmem>>, vector<256x256xf32>
      tpu.vector_store %arg5[%c0_8, %c0_9], %10 {strides = array<i32>} : memref<256x256xf32, #tpu.memory_space<vmem>>, vector<256x256xf32>,
    } else {
    }
    return
  }
  func.func @transform_0(%arg0: i32, %arg1: i32, %arg2: i32) -> (i32, i32) {
    %c0_i32 = arith.constant 0 : i32
    return %arg0, %arg2 : i32, i32
  }
  func.func @transform_1(%arg0: i32, %arg1: i32, %arg2: i32) -> (i32, i32) {
    %c0_i32 = arith.constant 0 : i32
    return %arg2, %arg1 : i32, i32
  }
  func.func @transform_2(%arg0: i32, %arg1: i32, %arg2: i32) -> (i32, i32) {
    %c0_i32 = arith.constant 0 : i32
    return %arg0, %arg1 : i32, i32
  }
}

</mosaic_0001>

<llo_original>
// kernel: tpu_custom_call.1
$region0: #{tpu_custom_call.1}
  #allocation0 [shape = 'u32[]', space=smem, size = 0x4, offset = 0x4, fixed_abs, tag = 'smem constant byte address 0x4 - core index']
  #allocation1 [shape = 'u32[72,128]{1,0:T(1,128)}', space=vmem, size = 0x9000, scoped, tag = 'internal scratch']
  %s0 = inlined_call_operand.hbm [shape: f32[256,512], index: 0, kind: input, shape index: {}]
  %s1 = inlined_call_operand.hbm [shape: f32[512,384], index: 1, kind: input, shape index: {}]
  %s2 = inlined_call_operand.hbm [shape: f32[256,384], index: 2, kind: output, shape index: {}]
  %s3 = sld [smem:[#allocation0]]
  $region57: #{tpu_custom_call.1} parent=0
    _
  %s5 = ssub.s32 1, %s3
  %s6 = scalar_select 0, %s5, %s3
  $region1: #{tpu_custom_call.1} parent=0
    #allocation2 [shape = 'u8[524288]{0}', space=vmem, size = 0x80000, scoped, tag = 'input window, operand 0, single buffered']
    #allocation3 [shape = 's32[2]{0}', space=sflag, size = 0x8, scoped, tag = 'scoped memory for tpu_custom_call.1']
    #allocation4 [shape = 's32[2]{0}', space=sflag, size = 0x8, scoped, tag = 'scoped memory for tpu_custom_call.1']
    #allocation5 [shape = 'u8[1048576]{0}', space=vmem, size = 0x100000, scoped, tag = 'input window, operand 1']
    #allocation6 [shape = 's32[2]{0}', space=sflag, size = 0x8, scoped, tag = 'scoped memory for tpu_custom_call.1']
    #allocation7 [shape = 'u8[524288]{0}', space=vmem, size = 0x80000, scoped, tag = 'output window, operand 0']
    %7 = vsyncpa [#allocation3], 0
    %8 = vsyncpa [#allocation6], 0
    %s9 = scalar_lea.sflag [#allocation6], 1
    %10 = vsyncpa %s9, 0
    %11 = vsyncpa [#allocation4], 0
    %s12 = scalar_lea.sflag [#allocation4], 1
    %13 = vsyncpa %s12, 0
    loop: start=0, step=1, limit=4
    $region2: #{tpu_custom_call.1} parent=1 // loop_pre_header
      _
    $region3: #{tpu_custom_call.1} parent=1 // loop_header
      %s15 = sphi 0, %s19
      %p16 = scmp.ge.s32.totalorder %s15, 4
      %s22 = sphi 0, %s41
      %s23 = sphi 0, %s37
      %s24 = sphi 0, %s33
      %s25 = sphi 0, %s22
      %s26 = sphi 0, %s23
      %s27 = sphi 0, %s24
      %s28 = sphi 0, %s25
      %s29 = sphi 0, %s26
      %s30 = sphi 0, %s27
      %s46 = sphi 0, %s48
      %s49 = sphi 0, %s46
      %s50 = sphi 0, %s49
      %s66 = sphi 0, %s50
      %s74 = sphi 0, %s76
      %s77 = sphi 0, %s74
      %s78 = sphi 0, %s77
      %s94 = sphi 0, %s78
      %s102 = sphi 0, %s104
      %s105 = sphi 0, %s102
      %s106 = sphi 0, %s105
      %s122 = sphi 0, %s106
    $region4: #{tpu_custom_call.1} parent=1 // loop_header_branch
      %18 = sbr.rel (%p16) target = $region8
    $region5: #{tpu_custom_call.1} parent=1 // loop_body
      %s20 = ssub.s32 %s15, 1
      %s21 = ssub.s32 %s15, 2
      %s31 = sadd.s32 1, %s24
      %p32 = scmp.ge.s32.totalorder %s31, 1
      %s33 = scalar_select %p32, 0, %s31
      %s34 = sadd.s32 1, %s23
      %s35 = scalar_select %p32, %s34, %s23
      %p36 = scmp.ge.s32.totalorder %s35, 2
      %s37 = scalar_select %p36, 0, %s35
      %s38 = sadd.s32 1, %s22
      %s39 = scalar_select %p36, %s38, %s22
      %p40 = scmp.ge.s32.totalorder %s39, 1
      %s41 = scalar_select %p40, 0, %s39
      %s42 = ssub.s32 %s22, %s41
      %s43 = ssub.s32 %s24, %s33
      %s44 = sor.u32 %s42, %s43
      %p45 = scmp.eq.s32.totalorder %s44, 0
      %s47 = sadd.s32 %s46, 1
      %s48 = scalar_select %p45, %s46, %s47
      %p51 = pneg %p45
      %p52 = scmp.eq.s32.totalorder %s15, 1
      %p53 = por %p51, %p52
      %p54 = scmp.ne.s32.totalorder %s46, %s49
      %p55 = scmp.eq.s32.totalorder %s15, 0
      %p56 = por %p54, %p55
      %p57 = scmp.ne.s32.totalorder %s46, %s49
      %p58 = scmp.eq.s32.totalorder %s20, 1
      %p59 = por %p57, %p58
      %p60 = scmp.ne.s32.totalorder %s49, %s50
      %p61 = scmp.eq.s32.totalorder %s20, 0
      %p62 = por %p60, %p61
      %p63 = scmp.ne.s32.totalorder %s49, %s50
      %p64 = scmp.eq.s32.totalorder %s21, 1
      %p65 = por %p63, %p64
      %p67 = scmp.ne.s32.totalorder %s50, %s66
      %p68 = scmp.eq.s32.totalorder %s21, 0
      %p69 = por %p67, %p68
      %s70 = ssub.s32 %s24, %s33
      %s71 = ssub.s32 %s23, %s37
      %s72 = sor.u32 %s70, %s71
      %p73 = scmp.eq.s32.totalorder %s72, 0
      %s75 = sadd.s32 %s74, 1
      %s76 = scalar_select %p73, %s74, %s75
      %p79 = pneg %p73
      %p80 = scmp.eq.s32.totalorder %s15, 1
      %p81 = por %p79, %p80
      %p82 = scmp.ne.s32.totalorder %s74, %s77
      %p83 = scmp.eq.s32.totalorder %s15, 0
      %p84 = por %p82, %p83
      %p85 = scmp.ne.s32.totalorder %s74, %s77
      %p86 = scmp.eq.s32.totalorder %s20, 1
      %p87 = por %p85, %p86
      %p88 = scmp.ne.s32.totalorder %s77, %s78
      %p89 = scmp.eq.s32.totalorder %s20, 0
      %p90 = por %p88, %p89
      %p91 = scmp.ne.s32.totalorder %s77, %s78
      %p92 = scmp.eq.s32.totalorder %s21, 1
      %p93 = por %p91, %p92
      %p95 = scmp.ne.s32.totalorder %s78, %s94
      %p96 = scmp.eq.s32.totalorder %s21, 0
      %p97 = por %p95, %p96
      %s98 = ssub.s32 %s22, %s41
      %s99 = ssub.s32 %s23, %s37
      %s100 = sor.u32 %s98, %s99
      %p101 = scmp.eq.s32.totalorder %s100, 0
      %s103 = sadd.s32 %s102, 1
      %s104 = scalar_select %p101, %s102, %s103
      %p107 = pneg %p101
      %p108 = scmp.eq.s32.totalorder %s15, 1
      %p109 = por %p107, %p108
      %p110 = scmp.ne.s32.totalorder %s102, %s105
      %p111 = scmp.eq.s32.totalorder %s15, 0
      %p112 = por %p110, %p111
      %p113 = scmp.ne.s32.totalorder %s102, %s105
      %p114 = scmp.eq.s32.totalorder %s20, 1
      %p115 = por %p113, %p114
      %p116 = scmp.ne.s32.totalorder %s105, %s106
      %p117 = scmp.eq.s32.totalorder %s20, 0
      %p118 = por %p116, %p117
      %p119 = scmp.ne.s32.totalorder %s105, %s106
      %p120 = scmp.eq.s32.totalorder %s21, 1
      %p121 = por %p119, %p120
      %p123 = scmp.ne.s32.totalorder %s106, %s122
      %p124 = scmp.eq.s32.totalorder %s21, 0
      %p125 = por %p123, %p124
      %p126 = scmp.le.s32.totalorder 1, %s15
      %p127 = scmp.lt.s32.totalorder %s15, 3
      %p128 = pnand %p126, %p127
      %p129 = pneg %p128
      // Predicated region
      $region9: #{tpu_custom_call.1} parent=5 // pred_check
        _
      $region10: #{tpu_custom_call.1} parent=5 // pred_check_branch
        %131 = sbr.rel (%p128) target = $region12
      $region11: #{tpu_custom_call.1} parent=5 // pred_region
        %s132 = ssub.s32 %s15, 1
        // Predicated region
        $region13: #{tpu_custom_call.1} parent=11 // pred_check
          %p133 = pneg %p62
        $region14: #{tpu_custom_call.1} parent=11 // pred_check_branch
          %135 = sbr.rel (%p133) target = $region16
        $region15: #{tpu_custom_call.1} parent=11 // pred_region
          %s136 = smul.u32 32, %s25
          %s137 = smul.u32 4, %s27
          %139 = vsyncadd [#allocation3], 0
          %s140 = smul.addr %s136, 4
          %s141 = sadd.s32 %s137, %s140
          %s142 = smul.addr %s141, 8
          %s143 = scalar_lea.hbm %s0, %s142
          %s144 = sshll.u32 %s143, 4
          %s145 = int_to_ptr.hbm [resolvable:$true] %s144
          %s146 = sshll.u32 [#allocation2], 4
          %s147 = int_to_ptr.vmem [resolvable:$true] %s146
          %152 = dma.hbm_to_vmem [thread:$0]  %s145, 16384, %s147, [#allocation3], 512, 512, 32
        $region16: #{tpu_custom_call.1} parent=11 // pred_fallthru
          _
      $region12: #{tpu_custom_call.1} parent=5 // pred_fallthru
        _
      %p153 = scmp.lt.s32.totalorder %s15, 2
      // Predicated region
      $region17: #{tpu_custom_call.1} parent=5 // pred_check
        %p154 = pneg %p153
      $region18: #{tpu_custom_call.1} parent=5 // pred_check_branch
        %156 = sbr.rel (%p154) target = $region20
      $region19: #{tpu_custom_call.1} parent=5 // pred_region
        // Predicated region
        $region21: #{tpu_custom_call.1} parent=19 // pred_check
          %p157 = pneg %p84
        $region22: #{tpu_custom_call.1} parent=19 // pred_check_branch
          %159 = sbr.rel (%p157) target = $region24
        $region23: #{tpu_custom_call.1} parent=19 // pred_region
          %s160 = sand.u32 %s74, 1
          %s161 = scalar_lea.sflag [#allocation6], %s160
          %s162 = sand.u32 %s74, 1
          %s163 = smul.addr %s162, 1024
          %s164 = scalar_lea.vmem [#allocation5], %s163
          %s165 = smul.u32 64, %s24
          %s166 = smul.u32 2, %s23
          %s167 = ssub.s32 3, %s166
          %p168 = scmp.lt.s32.totalorder %s167, 2
          %s169 = scalar_select %p168, %s167, 2
          %s170 = smul.u32 512, %s169
          %s171 = ssub.s32 1024, %s170
          %s172 = sshll.u32 %s171, 4
          %173 = vsyncadd %s161, %s172
          %p174 = scmp.ne.s32.totalorder 0, %s170
          %s175 = smul.addr %s165, 3
          %s176 = sadd.s32 %s166, %s175
          %s177 = smul.addr %s176, 8
          %s178 = scalar_lea.hbm %s1, %s177
          %s179 = smul.u32 %s169, 8
          %s180 = smul.u32 %s179, 64
          %s181 = sshll.u32 %s178, 4
          %s182 = int_to_ptr.hbm [resolvable:$true] %s181
          %s183 = sshll.u32 %s164, 4
          %s184 = int_to_ptr.vmem [resolvable:$true] %s183
          %s185 = sshll.u32 %s180, 4
          %189 = dma.hbm_to_vmem [thread:$0]  (%p174), %s182, %s185, %s184, %s161, 384, 256, %s179
        $region24: #{tpu_custom_call.1} parent=19 // pred_fallthru
          _
      $region20: #{tpu_custom_call.1} parent=5 // pred_fallthru
        _
      %p190 = scmp.le.s32.totalorder 1, %s15
      %p191 = scmp.lt.s32.totalorder %s15, 3
      %p192 = pnand %p190, %p191
      %p193 = pneg %p192
      // Predicated region
      $region25: #{tpu_custom_call.1} parent=5 // pred_check
        _
      $region26: #{tpu_custom_call.1} parent=5 // pred_check_branch
        %195 = sbr.rel (%p192) target = $region28
      $region27: #{tpu_custom_call.1} parent=5 // pred_region
        %s196 = ssub.s32 %s15, 1
        // Predicated region
        $region29: #{tpu_custom_call.1} parent=27 // pred_check
          %p197 = pneg %p62
        $region30: #{tpu_custom_call.1} parent=27 // pred_check_branch
          %199 = sbr.rel (%p197) target = $region32
        $region31: #{tpu_custom_call.1} parent=27 // pred_region
          %201 = dma.done [#allocation3], 16384
        $region32: #{tpu_custom_call.1} parent=27 // pred_fallthru
          _
        %s202 = sand.u32 %s77, 1
        %s203 = scalar_lea.sflag [#allocation6], %s202
        %s204 = sand.u32 %s77, 1
        %s205 = smul.addr %s204, 1024
        %s206 = scalar_lea.vmem [#allocation5], %s205
        // Predicated region
        $region33: #{tpu_custom_call.1} parent=27 // pred_check
          %p207 = pneg %p90
        $region34: #{tpu_custom_call.1} parent=27 // pred_check_branch
          %209 = sbr.rel (%p207) target = $region36
        $region35: #{tpu_custom_call.1} parent=27 // pred_region
          %211 = dma.done %s203, 16384
        $region36: #{tpu_custom_call.1} parent=27 // pred_fallthru
          _
        %p212 = pneg %p62
        %p213 = pneg %p59
        %s214 = sand.u32 %s77, 1
        %s215 = scalar_lea.sflag [#allocation6], %s214
        %s216 = sand.u32 %s77, 1
        %s217 = smul.addr %s216, 1024
        %s218 = scalar_lea.vmem [#allocation5], %s217
        %p219 = pneg %p90
        %p220 = pneg %p87
        %p221 = pneg %p118
        %p222 = pneg %p115
        %s223 = sand.u32 %s105, 1
        %s224 = scalar_lea.sflag [#allocation4], %s223
        %s225 = sand.u32 %s105, 1
        %s226 = smul.addr %s225, 512
        %s227 = scalar_lea.vmem [#allocation7], %s226
        %s228 = smul.u32 32, %s25
        %s229 = smul.u32 4, %s27
        %s230 = smul.u32 64, %s27
        %s231 = smul.u32 2, %s26
        %s232 = ssub.s32 3, %s231
        %p233 = scmp.lt.s32.totalorder %s232, 2
        %s234 = scalar_select %p233, %s232, 2
        %s235 = smul.u32 512, %s234
        %s236 = smul.u32 32, %s25
        %s237 = smul.u32 2, %s26
        %s238 = ssub.s32 3, %s237
        %p239 = scmp.lt.s32.totalorder %s238, 2
        %s240 = scalar_select %p239, %s238, 2
        %s241 = smul.u32 256, %s240
        %v242 = vld [vmem:[#allocation2] sm:$0xff]
        %v243 = vld [vmem:[#allocation2 + $0x8] sm:$0xff]
        %v244 = vld [vmem:[#allocation2 + $0x10] sm:$0xff]
        %v245 = vld [vmem:[#allocation2 + $0x18] sm:$0xff]
        %v246 = vld [vmem:[#allocation2 + $0x20] sm:$0xff]
        %v247 = vld [vmem:[#allocation2 + $0x28] sm:$0xff]
        %v248 = vld [vmem:[#allocation2 + $0x30] sm:$0xff]
        %v249 = vld [vmem:[#allocation2 + $0x38] sm:$0xff]
        %v250 = vld [vmem:[#allocation2 + $0x40] sm:$0xff]
        %v251 = vld [vmem:[#allocation2 + $0x48] sm:$0xff]
        %v252 = vld [vmem:[#allocation2 + $0x50] sm:$0xff]
        %v253 = vld [vmem:[#allocation2 + $0x58] sm:$0xff]
        %v254 = vld [vmem:[#allocation2 + $0x60] sm:$0xff]
        %v255 = vld [vmem:[#allocation2 + $0x68] sm:$0xff]
        %v256 = vld [vmem:[#allocation2 + $0x70] sm:$0xff]
        %v257 = vld [vmem:[#allocation2 + $0x78] sm:$0xff]
        %v258 = vld [vmem:[#allocation2 + $0x80] sm:$0xff]
        %v259 = vld [vmem:[#allocation2 + $0x88] sm:$0xff]
        %v260 = vld [vmem:[#allocation2 + $0x90] sm:$0xff]
        %v261 = vld [vmem:[#allocation2 + $0x98] sm:$0xff]
        %v262 = vld [vmem:[#allocation2 + $0xa0] sm:$0xff]
        %v263 = vld [vmem:[#allocation2 + $0xa8] sm:$0xff]
        %v264 = vld [vmem:[#allocation2 + $0xb0] sm:$0xff]
        %v265 = vld [vmem:[#allocation2 + $0xb8] sm:$0xff]
        %v266 = vld [vmem:[#allocation2 + $0xc0] sm:$0xff]
        %v267 = vld [vmem:[#allocation2 + $0xc8] sm:$0xff]
        %v268 = vld [vmem:[#allocation2 + $0xd0] sm:$0xff]
        %v269 = vld [vmem:[#allocation2 + $0xd8] sm:$0xff]
        %v270 = vld [vmem:[#allocation2 + $0xe0] sm:$0xff]
        %v271 = vld [vmem:[#allocation2 + $0xe8] sm:$0xff]
        %v272 = vld [vmem:[#allocation2 + $0xf0] sm:$0xff]
        %v273 = vld [vmem:[#allocation2 + $0xf8] sm:$0xff]
        %v274 = vld [vmem:[#allocation2 + $0x100] sm:$0xff]
        %v275 = vld [vmem:[#allocation2 + $0x108] sm:$0xff]
        %v276 = vld [vmem:[#allocation2 + $0x110] sm:$0xff]
        %v277 = vld [vmem:[#allocation2 + $0x118] sm:$0xff]
        %v278 = vld [vmem:[#allocation2 + $0x120] sm:$0xff]
        %v279 = vld [vmem:[#allocation2 + $0x128] sm:$0xff]
        %v280 = vld [vmem:[#allocation2 + $0x130] sm:$0xff]
        %v281 = vld [vmem:[#allocation2 + $0x138] sm:$0xff]
        %v282 = vld [vmem:[#allocation2 + $0x140] sm:$0xff]
        %v283 = vld [vmem:[#allocation2 + $0x148] sm:$0xff]
        %v284 = vld [vmem:[#allocation2 + $0x150] sm:$0xff]
        %v285 = vld [vmem:[#allocation2 + $0x158] sm:$0xff]
        %v286 = vld [vmem:[#allocation2 + $0x160] sm:$0xff]
        %v287 = vld [vmem:[#allocation2 + $0x168] sm:$0xff]
        %v288 = vld [vmem:[#allocation2 + $0x170] sm:$0xff]
        %v289 = vld [vmem:[#allocation2 + $0x178] sm:$0xff]
        %v290 = vld [vmem:[#allocation2 + $0x180] sm:$0xff]
        %v291 = vld [vmem:[#allocation2 + $0x188] sm:$0xff]
        %v292 = vld [vmem:[#allocation2 + $0x190] sm:$0xff]
        %v293 = vld [vmem:[#allocation2 + $0x198] sm:$0xff]
        %v294 = vld [vmem:[#allocation2 + $0x1a0] sm:$0xff]
        %v295 = vld [vmem:[#allocation2 + $0x1a8] sm:$0xff]
        %v296 = vld [vmem:[#allocation2 + $0x1b0] sm:$0xff]
        %v297 = vld [vmem:[#allocation2 + $0x1b8] sm:$0xff]
        %v298 = vld [vmem:[#allocation2 + $0x1c0] sm:$0xff]
        %v299 = vld [vmem:[#allocation2 + $0x1c8] sm:$0xff]
        %v300 = vld [vmem:[#allocation2 + $0x1d0] sm:$0xff]
        %v301 = vld [vmem:[#allocation2 + $0x1d8] sm:$0xff]
        %v302 = vld [vmem:[#allocation2 + $0x1e0] sm:$0xff]
        %v303 = vld [vmem:[#allocation2 + $0x1e8] sm:$0xff]
        %v304 = vld [vmem:[#allocation2 + $0x1f0] sm:$0xff]
        %v305 = vld [vmem:[#allocation2 + $0x1f8] sm:$0xff]
        %v306 = vld [vmem:[#allocation2 + $0x200] sm:$0xff]
        %v307 = vld [vmem:[#allocation2 + $0x208] sm:$0xff]
        %v308 = vld [vmem:[#allocation2 + $0x210] sm:$0xff]
        %v309 = vld [vmem:[#allocation2 + $0x218] sm:$0xff]
        %v310 = vld [vmem:[#allocation2 + $0x220] sm:$0xff]
        %v311 = vld [vmem:[#allocation2 + $0x228] sm:$0xff]
        %v312 = vld [vmem:[#allocation2 + $0x230] sm:$0xff]
        %v313 = vld [vmem:[#allocation2 + $0x238] sm:$0xff]
        %v314 = vld [vmem:[#allocation2 + $0x240] sm:$0xff]
        %v315 = vld [vmem:[#allocation2 + $0x248] sm:$0xff]
        %v316 = vld [vmem:[#allocation2 + $0x250] sm:$0xff]
        %v317 = vld [vmem:[#allocation2 + $0x258] sm:$0xff]
        %v318 = vld [vmem:[#allocation2 + $0x260] sm:$0xff]
        %v319 = vld [vmem:[#allocation2 + $0x268] sm:$0xff]
        %v320 = vld [vmem:[#allocation2 + $0x270] sm:$0xff]
        %v321 = vld [vmem:[#allocation2 + $0x278] sm:$0xff]
        %v322 = vld [vmem:[#allocation2 + $0x280] sm:$0xff]
        %v323 = vld [vmem:[#allocation2 + $0x288] sm:$0xff]
        %v324 = vld [vmem:[#allocation2 + $0x290] sm:$0xff]
        %v325 = vld [vmem:[#allocation2 + $0x298] sm:$0xff]
        %v326 = vld [vmem:[#allocation2 + $0x2a0] sm:$0xff]
        %v327 = vld [vmem:[#allocation2 + $0x2a8] sm:$0xff]
        %v328 = vld [vmem:[#allocation2 + $0x2b0] sm:$0xff]
        %v329 = vld [vmem:[#allocation2 + $0x2b8] sm:$0xff]
        %v330 = vld [vmem:[#allocation2 + $0x2c0] sm:$0xff]
        %v331 = vld [vmem:[#allocation2 + $0x2c8] sm:$0xff]
        %v332 = vld [vmem:[#allocation2 + $0x2d0] sm:$0xff]
        %v333 = vld [vmem:[#allocation2 + $0x2d8] sm:$0xff]
        %v334 = vld [vmem:[#allocation2 + $0x2e0] sm:$0xff]
        %v335 = vld [vmem:[#allocation2 + $0x2e8] sm:$0xff]
        %v336 = vld [vmem:[#allocation2 + $0x2f0] sm:$0xff]
        %v337 = vld [vmem:[#allocation2 + $0x2f8] sm:$0xff]
        %v338 = vld [vmem:[#allocation2 + $0x300] sm:$0xff]
        %v339 = vld [vmem:[#allocation2 + $0x308] sm:$0xff]
        %v340 = vld [vmem:[#allocation2 + $0x310] sm:$0xff]
        %v341 = vld [vmem:[#allocation2 + $0x318] sm:$0xff]
        %v342 = vld [vmem:[#allocation2 + $0x320] sm:$0xff]
        %v343 = vld [vmem:[#allocation2 + $0x328] sm:$0xff]
        %v344 = vld [vmem:[#allocation2 + $0x330] sm:$0xff]
        %v345 = vld [vmem:[#allocation2 + $0x338] sm:$0xff]
        %v346 = vld [vmem:[#allocation2 + $0x340] sm:$0xff]
        %v347 = vld [vmem:[#allocation2 + $0x348] sm:$0xff]
        %v348 = vld [vmem:[#allocation2 + $0x350] sm:$0xff]
        %v349 = vld [vmem:[#allocation2 + $0x358] sm:$0xff]
        %v350 = vld [vmem:[#allocation2 + $0x360] sm:$0xff]
        %v351 = vld [vmem:[#allocation2 + $0x368] sm:$0xff]
        %v352 = vld [vmem:[#allocation2 + $0x370] sm:$0xff]
        %v353 = vld [vmem:[#allocation2 + $0x378] sm:$0xff]
        %v354 = vld [vmem:[#allocation2 + $0x380] sm:$0xff]
        %v355 = vld [vmem:[#allocation2 + $0x388] sm:$0xff]
        %v356 = vld [vmem:[#allocation2 + $0x390] sm:$0xff]
        %v357 = vld [vmem:[#allocation2 + $0x398] sm:$0xff]
        %v358 = vld [vmem:[#allocation2 + $0x3a0] sm:$0xff]
        %v359 = vld [vmem:[#allocation2 + $0x3a8] sm:$0xff]
        %v360 = vld [vmem:[#allocation2 + $0x3b0] sm:$0xff]
        %v361 = vld [vmem:[#allocation2 + $0x3b8] sm:$0xff]
        %v362 = vld [vmem:[#allocation2 + $0x3c0] sm:$0xff]
        %v363 = vld [vmem:[#allocation2 + $0x3c8] sm:$0xff]
        %v364 = vld [vmem:[#allocation2 + $0x3d0] sm:$0xff]
        %v365 = vld [vmem:[#allocation2 + $0x3d8] sm:$0xff]
        %v366 = vld [vmem:[#allocation2 + $0x3e0] sm:$0xff]
        %v367 = vld [vmem:[#allocation2 + $0x3e8] sm:$0xff]
        %v368 = vld [vmem:[#allocation2 + $0x3f0] sm:$0xff]
        %v369 = vld [vmem:[#allocation2 + $0x3f8] sm:$0xff]
        %v370 = vld [vmem:[%s206] sm:$0xff]
        %v371 = vld [vmem:[%s206 + $0x8] sm:$0xff]
        %v372 = vld [vmem:[%s206 + $0x10] sm:$0xff]
        %v373 = vld [vmem:[%s206 + $0x18] sm:$0xff]
        %v374 = vld [vmem:[%s206 + $0x20] sm:$0xff]
        %v375 = vld [vmem:[%s206 + $0x28] sm:$0xff]
        %v376 = vld [vmem:[%s206 + $0x30] sm:$0xff]
        %v377 = vld [vmem:[%s206 + $0x38] sm:$0xff]
        %v378 = vld [vmem:[%s206 + $0x40] sm:$0xff]
        %v379 = vld [vmem:[%s206 + $0x48] sm:$0xff]
        %v380 = vld [vmem:[%s206 + $0x50] sm:$0xff]
        %v381 = vld [vmem:[%s206 + $0x58] sm:$0xff]
        %v382 = vld [vmem:[%s206 + $0x60] sm:$0xff]
        %v383 = vld [vmem:[%s206 + $0x68] sm:$0xff]
        %v384 = vld [vmem:[%s206 + $0x70] sm:$0xff]
        %v385 = vld [vmem:[%s206 + $0x78] sm:$0xff]
        %v386 = vld [vmem:[%s206 + $0x80] sm:$0xff]
        %v387 = vld [vmem:[%s206 + $0x88] sm:$0xff]
        %v388 = vld [vmem:[%s206 + $0x90] sm:$0xff]
        %v389 = vld [vmem:[%s206 + $0x98] sm:$0xff]
        %v390 = vld [vmem:[%s206 + $0xa0] sm:$0xff]
        %v391 = vld [vmem:[%s206 + $0xa8] sm:$0xff]
        %v392 = vld [vmem:[%s206 + $0xb0] sm:$0xff]
        %v393 = vld [vmem:[%s206 + $0xb8] sm:$0xff]
        %v394 = vld [vmem:[%s206 + $0xc0] sm:$0xff]
        %v395 = vld [vmem:[%s206 + $0xc8] sm:$0xff]
        %v396 = vld [vmem:[%s206 + $0xd0] sm:$0xff]
        %v397 = vld [vmem:[%s206 + $0xd8] sm:$0xff]
        %v398 = vld [vmem:[%s206 + $0xe0] sm:$0xff]
        %v399 = vld [vmem:[%s206 + $0xe8] sm:$0xff]
        %v400 = vld [vmem:[%s206 + $0xf0] sm:$0xff]
        %v401 = vld [vmem:[%s206 + $0xf8] sm:$0xff]
        %v402 = vld [vmem:[%s206 + $0x100] sm:$0xff]
        %v403 = vld [vmem:[%s206 + $0x108] sm:$0xff]
        %v404 = vld [vmem:[%s206 + $0x110] sm:$0xff]
        %v405 = vld [vmem:[%s206 + $0x118] sm:$0xff]
        %v406 = vld [vmem:[%s206 + $0x120] sm:$0xff]
        %v407 = vld [vmem:[%s206 + $0x128] sm:$0xff]
        %v408 = vld [vmem:[%s206 + $0x130] sm:$0xff]
        %v409 = vld [vmem:[%s206 + $0x138] sm:$0xff]
        %v410 = vld [vmem:[%s206 + $0x140] sm:$0xff]
        %v411 = vld [vmem:[%s206 + $0x148] sm:$0xff]
        %v412 = vld [vmem:[%s206 + $0x150] sm:$0xff]
        %v413 = vld [vmem:[%s206 + $0x158] sm:$0xff]
        %v414 = vld [vmem:[%s206 + $0x160] sm:$0xff]
        %v415 = vld [vmem:[%s206 + $0x168] sm:$0xff]
        %v416 = vld [vmem:[%s206 + $0x170] sm:$0xff]
        %v417 = vld [vmem:[%s206 + $0x178] sm:$0xff]
        %v418 = vld [vmem:[%s206 + $0x180] sm:$0xff]
        %v419 = vld [vmem:[%s206 + $0x188] sm:$0xff]
        %v420 = vld [vmem:[%s206 + $0x190] sm:$0xff]
        %v421 = vld [vmem:[%s206 + $0x198] sm:$0xff]
        %v422 = vld [vmem:[%s206 + $0x1a0] sm:$0xff]
        %v423 = vld [vmem:[%s206 + $0x1a8] sm:$0xff]
        %v424 = vld [vmem:[%s206 + $0x1b0] sm:$0xff]
        %v425 = vld [vmem:[%s206 + $0x1b8] sm:$0xff]
        %v426 = vld [vmem:[%s206 + $0x1c0] sm:$0xff]
        %v427 = vld [vmem:[%s206 + $0x1c8] sm:$0xff]
        %v428 = vld [vmem:[%s206 + $0x1d0] sm:$0xff]
        %v429 = vld [vmem:[%s206 + $0x1d8] sm:$0xff]
        %v430 = vld [vmem:[%s206 + $0x1e0] sm:$0xff]
        %v431 = vld [vmem:[%s206 + $0x1e8] sm:$0xff]
        %v432 = vld [vmem:[%s206 + $0x1f0] sm:$0xff]
        %v433 = vld [vmem:[%s206 + $0x1f8] sm:$0xff]
        %v434 = vld [vmem:[%s206 + $0x200] sm:$0xff]
        %v435 = vld [vmem:[%s206 + $0x208] sm:$0xff]
        %v436 = vld [vmem:[%s206 + $0x210] sm:$0xff]
        %v437 = vld [vmem:[%s206 + $0x218] sm:$0xff]
        %v438 = vld [vmem:[%s206 + $0x220] sm:$0xff]
        %v439 = vld [vmem:[%s206 + $0x228] sm:$0xff]
        %v440 = vld [vmem:[%s206 + $0x230] sm:$0xff]
        %v441 = vld [vmem:[%s206 + $0x238] sm:$0xff]
        %v442 = vld [vmem:[%s206 + $0x240] sm:$0xff]
        %v443 = vld [vmem:[%s206 + $0x248] sm:$0xff]
        %v444 = vld [vmem:[%s206 + $0x250] sm:$0xff]
        %v445 = vld [vmem:[%s206 + $0x258] sm:$0xff]
        %v446 = vld [vmem:[%s206 + $0x260] sm:$0xff]
        %v447 = vld [vmem:[%s206 + $0x268] sm:$0xff]
        %v448 = vld [vmem:[%s206 + $0x270] sm:$0xff]
        %v449 = vld [vmem:[%s206 + $0x278] sm:$0xff]
        %v450 = vld [vmem:[%s206 + $0x280] sm:$0xff]
        %v451 = vld [vmem:[%s206 + $0x288] sm:$0xff]
        %v452 = vld [vmem:[%s206 + $0x290] sm:$0xff]
        %v453 = vld [vmem:[%s206 + $0x298] sm:$0xff]
        %v454 = vld [vmem:[%s206 + $0x2a0] sm:$0xff]
        %v455 = vld [vmem:[%s206 + $0x2a8] sm:$0xff]
        %v456 = vld [vmem:[%s206 + $0x2b0] sm:$0xff]
        %v457 = vld [vmem:[%s206 + $0x2b8] sm:$0xff]
        %v458 = vld [vmem:[%s206 + $0x2c0] sm:$0xff]
        %v459 = vld [vmem:[%s206 + $0x2c8] sm:$0xff]
        %v460 = vld [vmem:[%s206 + $0x2d0] sm:$0xff]
        %v461 = vld [vmem:[%s206 + $0x2d8] sm:$0xff]
        %v462 = vld [vmem:[%s206 + $0x2e0] sm:$0xff]
        %v463 = vld [vmem:[%s206 + $0x2e8] sm:$0xff]
        %v464 = vld [vmem:[%s206 + $0x2f0] sm:$0xff]
        %v465 = vld [vmem:[%s206 + $0x2f8] sm:$0xff]
        %v466 = vld [vmem:[%s206 + $0x300] sm:$0xff]
        %v467 = vld [vmem:[%s206 + $0x308] sm:$0xff]
        %v468 = vld [vmem:[%s206 + $0x310] sm:$0xff]
        %v469 = vld [vmem:[%s206 + $0x318] sm:$0xff]
        %v470 = vld [vmem:[%s206 + $0x320] sm:$0xff]
        %v471 = vld [vmem:[%s206 + $0x328] sm:$0xff]
        %v472 = vld [vmem:[%s206 + $0x330] sm:$0xff]
        %v473 = vld [vmem:[%s206 + $0x338] sm:$0xff]
        %v474 = vld [vmem:[%s206 + $0x340] sm:$0xff]
        %v475 = vld [vmem:[%s206 + $0x348] sm:$0xff]
        %v476 = vld [vmem:[%s206 + $0x350] sm:$0xff]
        %v477 = vld [vmem:[%s206 + $0x358] sm:$0xff]
        %v478 = vld [vmem:[%s206 + $0x360] sm:$0xff]
        %v479 = vld [vmem:[%s206 + $0x368] sm:$0xff]
        %v480 = vld [vmem:[%s206 + $0x370] sm:$0xff]
        %v481 = vld [vmem:[%s206 + $0x378] sm:$0xff]
        %v482 = vld [vmem:[%s206 + $0x380] sm:$0xff]
        %v483 = vld [vmem:[%s206 + $0x388] sm:$0xff]
        %v484 = vld [vmem:[%s206 + $0x390] sm:$0xff]
        %v485 = vld [vmem:[%s206 + $0x398] sm:$0xff]
        %v486 = vld [vmem:[%s206 + $0x3a0] sm:$0xff]
        %v487 = vld [vmem:[%s206 + $0x3a8] sm:$0xff]
        %v488 = vld [vmem:[%s206 + $0x3b0] sm:$0xff]
        %v489 = vld [vmem:[%s206 + $0x3b8] sm:$0xff]
        %v490 = vld [vmem:[%s206 + $0x3c0] sm:$0xff]
        %v491 = vld [vmem:[%s206 + $0x3c8] sm:$0xff]
        %v492 = vld [vmem:[%s206 + $0x3d0] sm:$0xff]
        %v493 = vld [vmem:[%s206 + $0x3d8] sm:$0xff]
        %v494 = vld [vmem:[%s206 + $0x3e0] sm:$0xff]
        %v495 = vld [vmem:[%s206 + $0x3e8] sm:$0xff]
        %v496 = vld [vmem:[%s206 + $0x3f0] sm:$0xff]
        %v497 = vld [vmem:[%s206 + $0x3f8] sm:$0xff]
        %498 = vmatpush.msra.mxu0 %v400
        %499 = vmatpush.msra.mxu0 %v398
        %500 = vmatpush.msra.mxu0 %v396
        %501 = vmatpush.msra.mxu0 %v394
        %502 = vmatpush.msra.mxu0 %v392
        %503 = vmatpush.msra.mxu0 %v390
        %504 = vmatpush.msra.mxu0 %v388
        %505 = vmatpush.msra.mxu0 %v386
        %506 = vmatpush.msra.mxu0 %v384
        %507 = vmatpush.msra.mxu0 %v382
        %508 = vmatpush.msra.mxu0 %v380
        %509 = vmatpush.msra.mxu0 %v378
        %510 = vmatpush.msra.mxu0 %v376
        %511 = vmatpush.msra.mxu0 %v374
        %512 = vmatpush.msra.mxu0 %v372
        %513 = vmatpush.msra.mxu0 %v370
        %514 = vmatmul.f32.gmra.mxu0 %v242
        %v515 = vpop.f32.mrf.mxu0
        %v516 = vadd.f32 0.0, %v515
        %517 = vmatmul.f32.gmra.mxu0 %v246
        %v518 = vpop.f32.mrf.mxu0
        %v519 = vadd.f32 0.0, %v518
        %520 = vmatmul.f32.gmra.mxu0 %v250
        %v521 = vpop.f32.mrf.mxu0
        %v522 = vadd.f32 0.0, %v521
        %523 = vmatmul.f32.gmra.mxu0 %v254
        %v524 = vpop.f32.mrf.mxu0
        %v525 = vadd.f32 0.0, %v524
        %526 = vmatmul.f32.gmra.mxu0 %v258
        %v527 = vpop.f32.mrf.mxu0
        %v528 = vadd.f32 0.0, %v527
        %529 = vmatmul.f32.gmra.mxu0 %v262
        %v530 = vpop.f32.mrf.mxu0
        %v531 = vadd.f32 0.0, %v530
        %532 = vmatmul.f32.gmra.mxu0 %v266
        %v533 = vpop.f32.mrf.mxu0
        %v534 = vadd.f32 0.0, %v533
        %535 = vmatmul.f32.gmra.mxu0 %v270
        %v536 = vpop.f32.mrf.mxu0
        %v537 = vadd.f32 0.0, %v536
        %538 = vmatmul.f32.gmra.mxu0 %v274
        %v539 = vpop.f32.mrf.mxu0
        %v540 = vadd.f32 0.0, %v539
        %541 = vmatmul.f32.gmra.mxu0 %v278
        %v542 = vpop.f32.mrf.mxu0
        %v543 = vadd.f32 0.0, %v542
        %544 = vmatmul.f32.gmra.mxu0 %v282
        %v545 = vpop.f32.mrf.mxu0
        %v546 = vadd.f32 0.0, %v545
        %547 = vmatmul.f32.gmra.mxu0 %v286
        %v548 = vpop.f32.mrf.mxu0
        %v549 = vadd.f32 0.0, %v548
        %550 = vmatmul.f32.gmra.mxu0 %v290
        %v551 = vpop.f32.mrf.mxu0
        %v552 = vadd.f32 0.0, %v551
        %553 = vmatmul.f32.gmra.mxu0 %v294
        %v554 = vpop.f32.mrf.mxu0
        %v555 = vadd.f32 0.0, %v554
        %556 = vmatmul.f32.gmra.mxu0 %v298
        %v557 = vpop.f32.mrf.mxu0
        %v558 = vadd.f32 0.0, %v557
        %559 = vmatmul.f32.gmra.mxu0 %v302
        %v560 = vpop.f32.mrf.mxu0
        %v561 = vadd.f32 0.0, %v560
        %562 = vmatmul.f32.gmra.mxu0 %v306
        %v563 = vpop.f32.mrf.mxu0
        %v564 = vadd.f32 0.0, %v563
        %565 = vmatmul.f32.gmra.mxu0 %v310
        %v566 = vpop.f32.mrf.mxu0
        %v567 = vadd.f32 0.0, %v566
        %568 = vmatmul.f32.gmra.mxu0 %v314
        %v569 = vpop.f32.mrf.mxu0
        %v570 = vadd.f32 0.0, %v569
        %571 = vmatmul.f32.gmra.mxu0 %v318
        %v572 = vpop.f32.mrf.mxu0
        %v573 = vadd.f32 0.0, %v572
        %574 = vmatmul.f32.gmra.mxu0 %v322
        %v575 = vpop.f32.mrf.mxu0
        %v576 = vadd.f32 0.0, %v575
        %577 = vmatmul.f32.gmra.mxu0 %v326
        %v578 = vpop.f32.mrf.mxu0
        %v579 = vadd.f32 0.0, %v578
        %580 = vmatmul.f32.gmra.mxu0 %v330
        %v581 = vpop.f32.mrf.mxu0
        %v582 = vadd.f32 0.0, %v581
        %583 = vmatmul.f32.gmra.mxu0 %v334
        %v584 = vpop.f32.mrf.mxu0
        %v585 = vadd.f32 0.0, %v584
        %586 = vmatmul.f32.gmra.mxu0 %v338
        %v587 = vpop.f32.mrf.mxu0
        %v588 = vadd.f32 0.0, %v587
        %589 = vmatmul.f32.gmra.mxu0 %v342
        %v590 = vpop.f32.mrf.mxu0
        %v591 = vadd.f32 0.0, %v590
        %592 = vmatmul.f32.gmra.mxu0 %v346
        %v593 = vpop.f32.mrf.mxu0
        %v594 = vadd.f32 0.0, %v593
        %595 = vmatmul.f32.gmra.mxu0 %v350
        %v596 = vpop.f32.mrf.mxu0
        %v597 = vadd.f32 0.0, %v596
        %598 = vmatmul.f32.gmra.mxu0 %v354
        %v599 = vpop.f32.mrf.mxu0
        %v600 = vadd.f32 0.0, %v599
        %601 = vmatmul.f32.gmra.mxu0 %v358
        %v602 = vpop.f32.mrf.mxu0
        %v603 = vadd.f32 0.0, %v602
        %604 = vmatmul.f32.gmra.mxu0 %v362
        %v605 = vpop.f32.mrf.mxu0
        %v606 = vadd.f32 0.0, %v605
        %607 = vmatmul.f32.gmra.mxu0 %v366
        %v608 = vpop.f32.mrf.mxu0
        %v609 = vadd.f32 0.0, %v608
        %610 = vdwg.mxu0
        %611 = vmatpush.msra.mxu0 %v432
        %612 = vmatpush.msra.mxu0 %v430
        %613 = vmatpush.msra.mxu0 %v428
        %614 = vmatpush.msra.mxu0 %v426
        %615 = vmatpush.msra.mxu0 %v424
        %616 = vmatpush.msra.mxu0 %v422
        %617 = vmatpush.msra.mxu0 %v420
        %618 = vmatpush.msra.mxu0 %v418
        %619 = vmatpush.msra.mxu0 %v416
        %620 = vmatpush.msra.mxu0 %v414
        %621 = vmatpush.msra.mxu0 %v412
        %622 = vmatpush.msra.mxu0 %v410
        %623 = vmatpush.msra.mxu0 %v408
        %624 = vmatpush.msra.mxu0 %v406
        %625 = vmatpush.msra.mxu0 %v404
        %626 = vmatpush.msra.mxu0 %v402
        %627 = vmatmul.f32.gmra.mxu0 %v243
        %v628 = vpop.f32.mrf.mxu0
        %v629 = vadd.f32 %v516, %v628
        %630 = vmatmul.f32.gmra.mxu0 %v247
        %v631 = vpop.f32.mrf.mxu0
        %v632 = vadd.f32 %v519, %v631
        %633 = vmatmul.f32.gmra.mxu0 %v251
        %v634 = vpop.f32.mrf.mxu0
        %v635 = vadd.f32 %v522, %v634
        %636 = vmatmul.f32.gmra.mxu0 %v255
        %v637 = vpop.f32.mrf.mxu0
        %v638 = vadd.f32 %v525, %v637
        %639 = vmatmul.f32.gmra.mxu0 %v259
        %v640 = vpop.f32.mrf.mxu0
        %v641 = vadd.f32 %v528, %v640
        %642 = vmatmul.f32.gmra.mxu0 %v263
        %v643 = vpop.f32.mrf.mxu0
        %v644 = vadd.f32 %v531, %v643
        %645 = vmatmul.f32.gmra.mxu0 %v267
        %v646 = vpop.f32.mrf.mxu0
        %v647 = vadd.f32 %v534, %v646
        %648 = vmatmul.f32.gmra.mxu0 %v271
        %v649 = vpop.f32.mrf.mxu0
        %v650 = vadd.f32 %v537, %v649
        %651 = vmatmul.f32.gmra.mxu0 %v275
        %v652 = vpop.f32.mrf.mxu0
        %v653 = vadd.f32 %v540, %v652
        %654 = vmatmul.f32.gmra.mxu0 %v279
        %v655 = vpop.f32.mrf.mxu0
        %v656 = vadd.f32 %v543, %v655
        %657 = vmatmul.f32.gmra.mxu0 %v283
        %v658 = vpop.f32.mrf.mxu0
        %v659 = vadd.f32 %v546, %v658
        %660 = vmatmul.f32.gmra.mxu0 %v287
        %v661 = vpop.f32.mrf.mxu0
        %v662 = vadd.f32 %v549, %v661
        %663 = vmatmul.f32.gmra.mxu0 %v291
        %v664 = vpop.f32.mrf.mxu0
        %v665 = vadd.f32 %v552, %v664
        %666 = vmatmul.f32.gmra.mxu0 %v295
        %v667 = vpop.f32.mrf.mxu0
        %v668 = vadd.f32 %v555, %v667
        %669 = vmatmul.f32.gmra.mxu0 %v299
        %v670 = vpop.f32.mrf.mxu0
        %v671 = vadd.f32 %v558, %v670
        %672 = vmatmul.f32.gmra.mxu0 %v303
        %v673 = vpop.f32.mrf.mxu0
        %v674 = vadd.f32 %v561, %v673
        %675 = vmatmul.f32.gmra.mxu0 %v307
        %v676 = vpop.f32.mrf.mxu0
        %v677 = vadd.f32 %v564, %v676
        %678 = vmatmul.f32.gmra.mxu0 %v311
        %v679 = vpop.f32.mrf.mxu0
        %v680 = vadd.f32 %v567, %v679
        %681 = vmatmul.f32.gmra.mxu0 %v315
        %v682 = vpop.f32.mrf.mxu0
        %v683 = vadd.f32 %v570, %v682
        %684 = vmatmul.f32.gmra.mxu0 %v319
        %v685 = vpop.f32.mrf.mxu0
        %v686 = vadd.f32 %v573, %v685
        %687 = vmatmul.f32.gmra.mxu0 %v323
        %v688 = vpop.f32.mrf.mxu0
        %v689 = vadd.f32 %v576, %v688
        %690 = vmatmul.f32.gmra.mxu0 %v327
        %v691 = vpop.f32.mrf.mxu0
        %v692 = vadd.f32 %v579, %v691
        %693 = vmatmul.f32.gmra.mxu0 %v331
        %v694 = vpop.f32.mrf.mxu0
        %v695 = vadd.f32 %v582, %v694
        %696 = vmatmul.f32.gmra.mxu0 %v335
        %v697 = vpop.f32.mrf.mxu0
        %v698 = vadd.f32 %v585, %v697
        %699 = vmatmul.f32.gmra.mxu0 %v339
        %v700 = vpop.f32.mrf.mxu0
        %v701 = vadd.f32 %v588, %v700
        %702 = vmatmul.f32.gmra.mxu0 %v343
        %v703 = vpop.f32.mrf.mxu0
        %v704 = vadd.f32 %v591, %v703
        %705 = vmatmul.f32.gmra.mxu0 %v347
        %v706 = vpop.f32.mrf.mxu0
        %v707 = vadd.f32 %v594, %v706
        %708 = vmatmul.f32.gmra.mxu0 %v351
        %v709 = vpop.f32.mrf.mxu0
        %v710 = vadd.f32 %v597, %v709
        %711 = vmatmul.f32.gmra.mxu0 %v355
        %v712 = vpop.f32.mrf.mxu0
        %v713 = vadd.f32 %v600, %v712
        %714 = vmatmul.f32.gmra.mxu0 %v359
        %v715 = vpop.f32.mrf.mxu0
        %v716 = vadd.f32 %v603, %v715
        %717 = vmatmul.f32.gmra.mxu0 %v363
        %v718 = vpop.f32.mrf.mxu0
        %v719 = vadd.f32 %v606, %v718
        %720 = vmatmul.f32.gmra.mxu0 %v367
        %v721 = vpop.f32.mrf.mxu0
        %v722 = vadd.f32 %v609, %v721
        %723 = vdwg.mxu0
        %724 = vmatpush.msra.mxu0 %v464
        %725 = vmatpush.msra.mxu0 %v462
        %726 = vmatpush.msra.mxu0 %v460
        %727 = vmatpush.msra.mxu0 %v458
        %728 = vmatpush.msra.mxu0 %v456
        %729 = vmatpush.msra.mxu0 %v454
        %730 = vmatpush.msra.mxu0 %v452
        %731 = vmatpush.msra.mxu0 %v450
        %732 = vmatpush.msra.mxu0 %v448
        %733 = vmatpush.msra.mxu0 %v446
        %734 = vmatpush.msra.mxu0 %v444
        %735 = vmatpush.msra.mxu0 %v442
        %736 = vmatpush.msra.mxu0 %v440
        %737 = vmatpush.msra.mxu0 %v438
        %738 = vmatpush.msra.mxu0 %v436
        %739 = vmatpush.msra.mxu0 %v434
        %740 = vmatmul.f32.gmra.mxu0 %v244
        %v741 = vpop.f32.mrf.mxu0
        %v742 = vadd.f32 %v629, %v741
        %743 = vmatmul.f32.gmra.mxu0 %v248
        %v744 = vpop.f32.mrf.mxu0
        %v745 = vadd.f32 %v632, %v744
        %746 = vmatmul.f32.gmra.mxu0 %v252
        %v747 = vpop.f32.mrf.mxu0
        %v748 = vadd.f32 %v635, %v747
        %749 = vmatmul.f32.gmra.mxu0 %v256
        %v750 = vpop.f32.mrf.mxu0
        %v751 = vadd.f32 %v638, %v750
        %752 = vmatmul.f32.gmra.mxu0 %v260
        %v753 = vpop.f32.mrf.mxu0
        %v754 = vadd.f32 %v641, %v753
        %755 = vmatmul.f32.gmra.mxu0 %v264
        %v756 = vpop.f32.mrf.mxu0
        %v757 = vadd.f32 %v644, %v756
        %758 = vmatmul.f32.gmra.mxu0 %v268
        %v759 = vpop.f32.mrf.mxu0
        %v760 = vadd.f32 %v647, %v759
        %761 = vmatmul.f32.gmra.mxu0 %v272
        %v762 = vpop.f32.mrf.mxu0
        %v763 = vadd.f32 %v650, %v762
        %764 = vmatmul.f32.gmra.mxu0 %v276
        %v765 = vpop.f32.mrf.mxu0
        %v766 = vadd.f32 %v653, %v765
        %767 = vmatmul.f32.gmra.mxu0 %v280
        %v768 = vpop.f32.mrf.mxu0
        %v769 = vadd.f32 %v656, %v768
        %770 = vmatmul.f32.gmra.mxu0 %v284
        %v771 = vpop.f32.mrf.mxu0
        %v772 = vadd.f32 %v659, %v771
        %773 = vmatmul.f32.gmra.mxu0 %v288
        %v774 = vpop.f32.mrf.mxu0
        %v775 = vadd.f32 %v662, %v774
        %776 = vmatmul.f32.gmra.mxu0 %v292
        %v777 = vpop.f32.mrf.mxu0
        %v778 = vadd.f32 %v665, %v777
        %779 = vmatmul.f32.gmra.mxu0 %v296
        %v780 = vpop.f32.mrf.mxu0
        %v781 = vadd.f32 %v668, %v780
        %782 = vmatmul.f32.gmra.mxu0 %v300
        %v783 = vpop.f32.mrf.mxu0
        %v784 = vadd.f32 %v671, %v783
        %785 = vmatmul.f32.gmra.mxu0 %v304
        %v786 = vpop.f32.mrf.mxu0
        %v787 = vadd.f32 %v674, %v786
        %788 = vmatmul.f32.gmra.mxu0 %v308
        %v789 = vpop.f32.mrf.mxu0
        %v790 = vadd.f32 %v677, %v789
        %791 = vmatmul.f32.gmra.mxu0 %v312
        %v792 = vpop.f32.mrf.mxu0
        %v793 = vadd.f32 %v680, %v792
        %794 = vmatmul.f32.gmra.mxu0 %v316
        %v795 = vpop.f32.mrf.mxu0
        %v796 = vadd.f32 %v683, %v795
        %797 = vmatmul.f32.gmra.mxu0 %v320
        %v798 = vpop.f32.mrf.mxu0
        %v799 = vadd.f32 %v686, %v798
        %800 = vmatmul.f32.gmra.mxu0 %v324
        %v801 = vpop.f32.mrf.mxu0
        %v802 = vadd.f32 %v689, %v801
        %803 = vmatmul.f32.gmra.mxu0 %v328
        %v804 = vpop.f32.mrf.mxu0
        %v805 = vadd.f32 %v692, %v804
        %806 = vmatmul.f32.gmra.mxu0 %v332
        %v807 = vpop.f32.mrf.mxu0
        %v808 = vadd.f32 %v695, %v807
        %809 = vmatmul.f32.gmra.mxu0 %v336
        %v810 = vpop.f32.mrf.mxu0
        %v811 = vadd.f32 %v698, %v810
        %812 = vmatmul.f32.gmra.mxu0 %v340
        %v813 = vpop.f32.mrf.mxu0
        %v814 = vadd.f32 %v701, %v813
        %815 = vmatmul.f32.gmra.mxu0 %v344
        %v816 = vpop.f32.mrf.mxu0
        %v817 = vadd.f32 %v704, %v816
        %818 = vmatmul.f32.gmra.mxu0 %v348
        %v819 = vpop.f32.mrf.mxu0
        %v820 = vadd.f32 %v707, %v819
        %821 = vmatmul.f32.gmra.mxu0 %v352
        %v822 = vpop.f32.mrf.mxu0
        %v823 = vadd.f32 %v710, %v822
        %824 = vmatmul.f32.gmra.mxu0 %v356
        %v825 = vpop.f32.mrf.mxu0
        %v826 = vadd.f32 %v713, %v825
        %827 = vmatmul.f32.gmra.mxu0 %v360
        %v828 = vpop.f32.mrf.mxu0
        %v829 = vadd.f32 %v716, %v828
        %830 = vmatmul.f32.gmra.mxu0 %v364
        %v831 = vpop.f32.mrf.mxu0
        %v832 = vadd.f32 %v719, %v831
        %833 = vmatmul.f32.gmra.mxu0 %v368
        %v834 = vpop.f32.mrf.mxu0
        %v835 = vadd.f32 %v722, %v834
        %836 = vdwg.mxu0
        %837 = vmatpush.msra.mxu0 %v496
        %838 = vmatpush.msra.mxu0 %v494
        %839 = vmatpush.msra.mxu0 %v492
        %840 = vmatpush.msra.mxu0 %v490
        %841 = vmatpush.msra.mxu0 %v488
        %842 = vmatpush.msra.mxu0 %v486
        %843 = vmatpush.msra.mxu0 %v484
        %844 = vmatpush.msra.mxu0 %v482
        %845 = vmatpush.msra.mxu0 %v480
        %846 = vmatpush.msra.mxu0 %v478
        %847 = vmatpush.msra.mxu0 %v476
        %848 = vmatpush.msra.mxu0 %v474
        %849 = vmatpush.msra.mxu0 %v472
        %850 = vmatpush.msra.mxu0 %v470
        %851 = vmatpush.msra.mxu0 %v468
        %852 = vmatpush.msra.mxu0 %v466
        %853 = vmatmul.f32.gmra.mxu0 %v245
        %v854 = vpop.f32.mrf.mxu0
        %v855 = vadd.f32 %v742, %v854
        %856 = vmatmul.f32.gmra.mxu0 %v249
        %v857 = vpop.f32.mrf.mxu0
        %v858 = vadd.f32 %v745, %v857
        %859 = vmatmul.f32.gmra.mxu0 %v253
        %v860 = vpop.f32.mrf.mxu0
        %v861 = vadd.f32 %v748, %v860
        %862 = vmatmul.f32.gmra.mxu0 %v257
        %v863 = vpop.f32.mrf.mxu0
        %v864 = vadd.f32 %v751, %v863
        %865 = vmatmul.f32.gmra.mxu0 %v261
        %v866 = vpop.f32.mrf.mxu0
        %v867 = vadd.f32 %v754, %v866
        %868 = vmatmul.f32.gmra.mxu0 %v265
        %v869 = vpop.f32.mrf.mxu0
        %v870 = vadd.f32 %v757, %v869
        %871 = vmatmul.f32.gmra.mxu0 %v269
        %v872 = vpop.f32.mrf.mxu0
        %v873 = vadd.f32 %v760, %v872
        %874 = vmatmul.f32.gmra.mxu0 %v273
        %v875 = vpop.f32.mrf.mxu0
        %v876 = vadd.f32 %v763, %v875
        %877 = vmatmul.f32.gmra.mxu0 %v277
        %v878 = vpop.f32.mrf.mxu0
        %v879 = vadd.f32 %v766, %v878
        %880 = vmatmul.f32.gmra.mxu0 %v281
        %v881 = vpop.f32.mrf.mxu0
        %v882 = vadd.f32 %v769, %v881
        %883 = vmatmul.f32.gmra.mxu0 %v285
        %v884 = vpop.f32.mrf.mxu0
        %v885 = vadd.f32 %v772, %v884
        %886 = vmatmul.f32.gmra.mxu0 %v289
        %v887 = vpop.f32.mrf.mxu0
        %v888 = vadd.f32 %v775, %v887
        %889 = vmatmul.f32.gmra.mxu0 %v293
        %v890 = vpop.f32.mrf.mxu0
        %v891 = vadd.f32 %v778, %v890
        %892 = vmatmul.f32.gmra.mxu0 %v297
        %v893 = vpop.f32.mrf.mxu0
        %v894 = vadd.f32 %v781, %v893
        %895 = vmatmul.f32.gmra.mxu0 %v301
        %v896 = vpop.f32.mrf.mxu0
        %v897 = vadd.f32 %v784, %v896
        %898 = vmatmul.f32.gmra.mxu0 %v305
        %v899 = vpop.f32.mrf.mxu0
        %v900 = vadd.f32 %v787, %v899
        %901 = vmatmul.f32.gmra.mxu0 %v309
        %v902 = vpop.f32.mrf.mxu0
        %v903 = vadd.f32 %v790, %v902
        %904 = vmatmul.f32.gmra.mxu0 %v313
        %v905 = vpop.f32.mrf.mxu0
        %v906 = vadd.f32 %v793, %v905
        %907 = vmatmul.f32.gmra.mxu0 %v317
        %v908 = vpop.f32.mrf.mxu0
        %v909 = vadd.f32 %v796, %v908
        %910 = vmatmul.f32.gmra.mxu0 %v321
        %v911 = vpop.f32.mrf.mxu0
        %v912 = vadd.f32 %v799, %v911
        %913 = vmatmul.f32.gmra.mxu0 %v325
        %v914 = vpop.f32.mrf.mxu0
        %v915 = vadd.f32 %v802, %v914
        %916 = vmatmul.f32.gmra.mxu0 %v329
        %v917 = vpop.f32.mrf.mxu0
        %v918 = vadd.f32 %v805, %v917
        %919 = vmatmul.f32.gmra.mxu0 %v333
        %v920 = vpop.f32.mrf.mxu0
        %v921 = vadd.f32 %v808, %v920
        %922 = vmatmul.f32.gmra.mxu0 %v337
        %v923 = vpop.f32.mrf.mxu0
        %v924 = vadd.f32 %v811, %v923
        %925 = vmatmul.f32.gmra.mxu0 %v341
        %v926 = vpop.f32.mrf.mxu0
        %v927 = vadd.f32 %v814, %v926
        %928 = vmatmul.f32.gmra.mxu0 %v345
        %v929 = vpop.f32.mrf.mxu0
        %v930 = vadd.f32 %v817, %v929
        %931 = vmatmul.f32.gmra.mxu0 %v349
        %v932 = vpop.f32.mrf.mxu0
        %v933 = vadd.f32 %v820, %v932
        %934 = vmatmul.f32.gmra.mxu0 %v353
        %v935 = vpop.f32.mrf.mxu0
        %v936 = vadd.f32 %v823, %v935
        %937 = vmatmul.f32.gmra.mxu0 %v357
        %v938 = vpop.f32.mrf.mxu0
        %v939 = vadd.f32 %v826, %v938
        %940 = vmatmul.f32.gmra.mxu0 %v361
        %v941 = vpop.f32.mrf.mxu0
        %v942 = vadd.f32 %v829, %v941
        %943 = vmatmul.f32.gmra.mxu0 %v365
        %v944 = vpop.f32.mrf.mxu0
        %v945 = vadd.f32 %v832, %v944
        %946 = vmatmul.f32.gmra.mxu0 %v369
        %v947 = vpop.f32.mrf.mxu0
        %v948 = vadd.f32 %v835, %v947
        %949 = vdwg.mxu0
        %950 = vmatpush.msra.mxu0 %v401
        %951 = vmatpush.msra.mxu0 %v399
        %952 = vmatpush.msra.mxu0 %v397
        %953 = vmatpush.msra.mxu0 %v395
        %954 = vmatpush.msra.mxu0 %v393
        %955 = vmatpush.msra.mxu0 %v391
        %956 = vmatpush.msra.mxu0 %v389
        %957 = vmatpush.msra.mxu0 %v387
        %958 = vmatpush.msra.mxu0 %v385
        %959 = vmatpush.msra.mxu0 %v383
        %960 = vmatpush.msra.mxu0 %v381
        %961 = vmatpush.msra.mxu0 %v379
        %962 = vmatpush.msra.mxu0 %v377
        %963 = vmatpush.msra.mxu0 %v375
        %964 = vmatpush.msra.mxu0 %v373
        %965 = vmatpush.msra.mxu0 %v371
        %966 = vmatmul.f32.gmra.mxu0 %v242
        %v967 = vpop.f32.mrf.mxu0
        %v968 = vadd.f32 0.0, %v967
        %969 = vmatmul.f32.gmra.mxu0 %v246
        %v970 = vpop.f32.mrf.mxu0
        %v971 = vadd.f32 0.0, %v970
        %972 = vmatmul.f32.gmra.mxu0 %v250
        %v973 = vpop.f32.mrf.mxu0
        %v974 = vadd.f32 0.0, %v973
        %975 = vmatmul.f32.gmra.mxu0 %v254
        %v976 = vpop.f32.mrf.mxu0
        %v977 = vadd.f32 0.0, %v976
        %978 = vmatmul.f32.gmra.mxu0 %v258
        %v979 = vpop.f32.mrf.mxu0
        %v980 = vadd.f32 0.0, %v979
        %981 = vmatmul.f32.gmra.mxu0 %v262
        %v982 = vpop.f32.mrf.mxu0
        %v983 = vadd.f32 0.0, %v982
        %984 = vmatmul.f32.gmra.mxu0 %v266
        %v985 = vpop.f32.mrf.mxu0
        %v986 = vadd.f32 0.0, %v985
        %987 = vmatmul.f32.gmra.mxu0 %v270
        %v988 = vpop.f32.mrf.mxu0
        %v989 = vadd.f32 0.0, %v988
        %990 = vmatmul.f32.gmra.mxu0 %v274
        %v991 = vpop.f32.mrf.mxu0
        %v992 = vadd.f32 0.0, %v991
        %993 = vmatmul.f32.gmra.mxu0 %v278
        %v994 = vpop.f32.mrf.mxu0
        %v995 = vadd.f32 0.0, %v994
        %996 = vmatmul.f32.gmra.mxu0 %v282
        %v997 = vpop.f32.mrf.mxu0
        %v998 = vadd.f32 0.0, %v997
        %999 = vmatmul.f32.gmra.mxu0 %v286
        %v1000 = vpop.f32.mrf.mxu0
        %v1001 = vadd.f32 0.0, %v1000
        %1002 = vmatmul.f32.gmra.mxu0 %v290
        %v1003 = vpop.f32.mrf.mxu0
        %v1004 = vadd.f32 0.0, %v1003
        %1005 = vmatmul.f32.gmra.mxu0 %v294
        %v1006 = vpop.f32.mrf.mxu0
        %v1007 = vadd.f32 0.0, %v1006
        %1008 = vmatmul.f32.gmra.mxu0 %v298
        %v1009 = vpop.f32.mrf.mxu0
        %v1010 = vadd.f32 0.0, %v1009
        %1011 = vmatmul.f32.gmra.mxu0 %v302
        %v1012 = vpop.f32.mrf.mxu0
        %v1013 = vadd.f32 0.0, %v1012
        %1014 = vmatmul.f32.gmra.mxu0 %v306
        %v1015 = vpop.f32.mrf.mxu0
        %v1016 = vadd.f32 0.0, %v1015
        %1017 = vmatmul.f32.gmra.mxu0 %v310
        %v1018 = vpop.f32.mrf.mxu0
        %v1019 = vadd.f32 0.0, %v1018
        %1020 = vmatmul.f32.gmra.mxu0 %v314
        %v1021 = vpop.f32.mrf.mxu0
        %v1022 = vadd.f32 0.0, %v1021
        %1023 = vmatmul.f32.gmra.mxu0 %v318
        %v1024 = vpop.f32.mrf.mxu0
        %v1025 = vadd.f32 0.0, %v1024
        %1026 = vmatmul.f32.gmra.mxu0 %v322
        %v1027 = vpop.f32.mrf.mxu0
        %v1028 = vadd.f32 0.0, %v1027
        %1029 = vmatmul.f32.gmra.mxu0 %v326
        %v1030 = vpop.f32.mrf.mxu0
        %v1031 = vadd.f32 0.0, %v1030
        %1032 = vmatmul.f32.gmra.mxu0 %v330
        %v1033 = vpop.f32.mrf.mxu0
        %v1034 = vadd.f32 0.0, %v1033
        %1035 = vmatmul.f32.gmra.mxu0 %v334
        %v1036 = vpop.f32.mrf.mxu0
        %v1037 = vadd.f32 0.0, %v1036
        %1038 = vmatmul.f32.gmra.mxu0 %v338
        %v1039 = vpop.f32.mrf.mxu0
        %v1040 = vadd.f32 0.0, %v1039
        %1041 = vmatmul.f32.gmra.mxu0 %v342
        %v1042 = vpop.f32.mrf.mxu0
        %v1043 = vadd.f32 0.0, %v1042
        %1044 = vmatmul.f32.gmra.mxu0 %v346
        %v1045 = vpop.f32.mrf.mxu0
        %v1046 = vadd.f32 0.0, %v1045
        %1047 = vmatmul.f32.gmra.mxu0 %v350
        %v1048 = vpop.f32.mrf.mxu0
        %v1049 = vadd.f32 0.0, %v1048
        %1050 = vmatmul.f32.gmra.mxu0 %v354
        %v1051 = vpop.f32.mrf.mxu0
        %v1052 = vadd.f32 0.0, %v1051
        %1053 = vmatmul.f32.gmra.mxu0 %v358
        %v1054 = vpop.f32.mrf.mxu0
        %v1055 = vadd.f32 0.0, %v1054
        %1056 = vmatmul.f32.gmra.mxu0 %v362
        %v1057 = vpop.f32.mrf.mxu0
        %v1058 = vadd.f32 0.0, %v1057
        %1059 = vmatmul.f32.gmra.mxu0 %v366
        %v1060 = vpop.f32.mrf.mxu0
        %v1061 = vadd.f32 0.0, %v1060
        %1062 = vdwg.mxu0
        %1063 = vmatpush.msra.mxu0 %v433
        %1064 = vmatpush.msra.mxu0 %v431
        %1065 = vmatpush.msra.mxu0 %v429
        %1066 = vmatpush.msra.mxu0 %v427
        %1067 = vmatpush.msra.mxu0 %v425
        %1068 = vmatpush.msra.mxu0 %v423
        %1069 = vmatpush.msra.mxu0 %v421
        %1070 = vmatpush.msra.mxu0 %v419
        %1071 = vmatpush.msra.mxu0 %v417
        %1072 = vmatpush.msra.mxu0 %v415
        %1073 = vmatpush.msra.mxu0 %v413
        %1074 = vmatpush.msra.mxu0 %v411
        %1075 = vmatpush.msra.mxu0 %v409
        %1076 = vmatpush.msra.mxu0 %v407
        %1077 = vmatpush.msra.mxu0 %v405
        %1078 = vmatpush.msra.mxu0 %v403
        %1079 = vmatmul.f32.gmra.mxu0 %v243
        %v1080 = vpop.f32.mrf.mxu0
        %v1081 = vadd.f32 %v968, %v1080
        %1082 = vmatmul.f32.gmra.mxu0 %v247
        %v1083 = vpop.f32.mrf.mxu0
        %v1084 = vadd.f32 %v971, %v1083
        %1085 = vmatmul.f32.gmra.mxu0 %v251
        %v1086 = vpop.f32.mrf.mxu0
        %v1087 = vadd.f32 %v974, %v1086
        %1088 = vmatmul.f32.gmra.mxu0 %v255
        %v1089 = vpop.f32.mrf.mxu0
        %v1090 = vadd.f32 %v977, %v1089
        %1091 = vmatmul.f32.gmra.mxu0 %v259
        %v1092 = vpop.f32.mrf.mxu0
        %v1093 = vadd.f32 %v980, %v1092
        %1094 = vmatmul.f32.gmra.mxu0 %v263
        %v1095 = vpop.f32.mrf.mxu0
        %v1096 = vadd.f32 %v983, %v1095
        %1097 = vmatmul.f32.gmra.mxu0 %v267
        %v1098 = vpop.f32.mrf.mxu0
        %v1099 = vadd.f32 %v986, %v1098
        %1100 = vmatmul.f32.gmra.mxu0 %v271
        %v1101 = vpop.f32.mrf.mxu0
        %v1102 = vadd.f32 %v989, %v1101
        %1103 = vmatmul.f32.gmra.mxu0 %v275
        %v1104 = vpop.f32.mrf.mxu0
        %v1105 = vadd.f32 %v992, %v1104
        %1106 = vmatmul.f32.gmra.mxu0 %v279
        %v1107 = vpop.f32.mrf.mxu0
        %v1108 = vadd.f32 %v995, %v1107
        %1109 = vmatmul.f32.gmra.mxu0 %v283
        %v1110 = vpop.f32.mrf.mxu0
        %v1111 = vadd.f32 %v998, %v1110
        %1112 = vmatmul.f32.gmra.mxu0 %v287
        %v1113 = vpop.f32.mrf.mxu0
        %v1114 = vadd.f32 %v1001, %v1113
        %1115 = vmatmul.f32.gmra.mxu0 %v291
        %v1116 = vpop.f32.mrf.mxu0
        %v1117 = vadd.f32 %v1004, %v1116
        %1118 = vmatmul.f32.gmra.mxu0 %v295
        %v1119 = vpop.f32.mrf.mxu0
        %v1120 = vadd.f32 %v1007, %v1119
        %1121 = vmatmul.f32.gmra.mxu0 %v299
        %v1122 = vpop.f32.mrf.mxu0
        %v1123 = vadd.f32 %v1010, %v1122
        %1124 = vmatmul.f32.gmra.mxu0 %v303
        %v1125 = vpop.f32.mrf.mxu0
        %v1126 = vadd.f32 %v1013, %v1125
        %1127 = vmatmul.f32.gmra.mxu0 %v307
        %v1128 = vpop.f32.mrf.mxu0
        %v1129 = vadd.f32 %v1016, %v1128
        %1130 = vmatmul.f32.gmra.mxu0 %v311
        %v1131 = vpop.f32.mrf.mxu0
        %v1132 = vadd.f32 %v1019, %v1131
        %1133 = vmatmul.f32.gmra.mxu0 %v315
        %v1134 = vpop.f32.mrf.mxu0
        %v1135 = vadd.f32 %v1022, %v1134
        %1136 = vmatmul.f32.gmra.mxu0 %v319
        %v1137 = vpop.f32.mrf.mxu0
        %v1138 = vadd.f32 %v1025, %v1137
        %1139 = vmatmul.f32.gmra.mxu0 %v323
        %v1140 = vpop.f32.mrf.mxu0
        %v1141 = vadd.f32 %v1028, %v1140
        %1142 = vmatmul.f32.gmra.mxu0 %v327
        %v1143 = vpop.f32.mrf.mxu0
        %v1144 = vadd.f32 %v1031, %v1143
        %1145 = vmatmul.f32.gmra.mxu0 %v331
        %v1146 = vpop.f32.mrf.mxu0
        %v1147 = vadd.f32 %v1034, %v1146
        %1148 = vmatmul.f32.gmra.mxu0 %v335
        %v1149 = vpop.f32.mrf.mxu0
        %v1150 = vadd.f32 %v1037, %v1149
        %1151 = vmatmul.f32.gmra.mxu0 %v339
        %v1152 = vpop.f32.mrf.mxu0
        %v1153 = vadd.f32 %v1040, %v1152
        %1154 = vmatmul.f32.gmra.mxu0 %v343
        %v1155 = vpop.f32.mrf.mxu0
        %v1156 = vadd.f32 %v1043, %v1155
        %1157 = vmatmul.f32.gmra.mxu0 %v347
        %v1158 = vpop.f32.mrf.mxu0
        %v1159 = vadd.f32 %v1046, %v1158
        %1160 = vmatmul.f32.gmra.mxu0 %v351
        %v1161 = vpop.f32.mrf.mxu0
        %v1162 = vadd.f32 %v1049, %v1161
        %1163 = vmatmul.f32.gmra.mxu0 %v355
        %v1164 = vpop.f32.mrf.mxu0
        %v1165 = vadd.f32 %v1052, %v1164
        %1166 = vmatmul.f32.gmra.mxu0 %v359
        %v1167 = vpop.f32.mrf.mxu0
        %v1168 = vadd.f32 %v1055, %v1167
        %1169 = vmatmul.f32.gmra.mxu0 %v363
        %v1170 = vpop.f32.mrf.mxu0
        %v1171 = vadd.f32 %v1058, %v1170
        %1172 = vmatmul.f32.gmra.mxu0 %v367
        %v1173 = vpop.f32.mrf.mxu0
        %v1174 = vadd.f32 %v1061, %v1173
        %1175 = vdwg.mxu0
        %1176 = vmatpush.msra.mxu0 %v465
        %1177 = vmatpush.msra.mxu0 %v463
        %1178 = vmatpush.msra.mxu0 %v461
        %1179 = vmatpush.msra.mxu0 %v459
        %1180 = vmatpush.msra.mxu0 %v457
        %1181 = vmatpush.msra.mxu0 %v455
        %1182 = vmatpush.msra.mxu0 %v453
        %1183 = vmatpush.msra.mxu0 %v451
        %1184 = vmatpush.msra.mxu0 %v449
        %1185 = vmatpush.msra.mxu0 %v447
        %1186 = vmatpush.msra.mxu0 %v445
        %1187 = vmatpush.msra.mxu0 %v443
        %1188 = vmatpush.msra.mxu0 %v441
        %1189 = vmatpush.msra.mxu0 %v439
        %1190 = vmatpush.msra.mxu0 %v437
        %1191 = vmatpush.msra.mxu0 %v435
        %1192 = vmatmul.f32.gmra.mxu0 %v244
        %v1193 = vpop.f32.mrf.mxu0
        %v1194 = vadd.f32 %v1081, %v1193
        %1195 = vmatmul.f32.gmra.mxu0 %v248
        %v1196 = vpop.f32.mrf.mxu0
        %v1197 = vadd.f32 %v1084, %v1196
        %1198 = vmatmul.f32.gmra.mxu0 %v252
        %v1199 = vpop.f32.mrf.mxu0
        %v1200 = vadd.f32 %v1087, %v1199
        %1201 = vmatmul.f32.gmra.mxu0 %v256
        %v1202 = vpop.f32.mrf.mxu0
        %v1203 = vadd.f32 %v1090, %v1202
        %1204 = vmatmul.f32.gmra.mxu0 %v260
        %v1205 = vpop.f32.mrf.mxu0
        %v1206 = vadd.f32 %v1093, %v1205
        %1207 = vmatmul.f32.gmra.mxu0 %v264
        %v1208 = vpop.f32.mrf.mxu0
        %v1209 = vadd.f32 %v1096, %v1208
        %1210 = vmatmul.f32.gmra.mxu0 %v268
        %v1211 = vpop.f32.mrf.mxu0
        %v1212 = vadd.f32 %v1099, %v1211
        %1213 = vmatmul.f32.gmra.mxu0 %v272
        %v1214 = vpop.f32.mrf.mxu0
        %v1215 = vadd.f32 %v1102, %v1214
        %1216 = vmatmul.f32.gmra.mxu0 %v276
        %v1217 = vpop.f32.mrf.mxu0
        %v1218 = vadd.f32 %v1105, %v1217
        %1219 = vmatmul.f32.gmra.mxu0 %v280
        %v1220 = vpop.f32.mrf.mxu0
        %v1221 = vadd.f32 %v1108, %v1220
        %1222 = vmatmul.f32.gmra.mxu0 %v284
        %v1223 = vpop.f32.mrf.mxu0
        %v1224 = vadd.f32 %v1111, %v1223
        %1225 = vmatmul.f32.gmra.mxu0 %v288
        %v1226 = vpop.f32.mrf.mxu0
        %v1227 = vadd.f32 %v1114, %v1226
        %1228 = vmatmul.f32.gmra.mxu0 %v292
        %v1229 = vpop.f32.mrf.mxu0
        %v1230 = vadd.f32 %v1117, %v1229
        %1231 = vmatmul.f32.gmra.mxu0 %v296
        %v1232 = vpop.f32.mrf.mxu0
        %v1233 = vadd.f32 %v1120, %v1232
        %1234 = vmatmul.f32.gmra.mxu0 %v300
        %v1235 = vpop.f32.mrf.mxu0
        %v1236 = vadd.f32 %v1123, %v1235
        %1237 = vmatmul.f32.gmra.mxu0 %v304
        %v1238 = vpop.f32.mrf.mxu0
        %v1239 = vadd.f32 %v1126, %v1238
        %1240 = vmatmul.f32.gmra.mxu0 %v308
        %v1241 = vpop.f32.mrf.mxu0
        %v1242 = vadd.f32 %v1129, %v1241
        %1243 = vmatmul.f32.gmra.mxu0 %v312
        %v1244 = vpop.f32.mrf.mxu0
        %v1245 = vadd.f32 %v1132, %v1244
        %1246 = vmatmul.f32.gmra.mxu0 %v316
        %v1247 = vpop.f32.mrf.mxu0
        %v1248 = vadd.f32 %v1135, %v1247
        %1249 = vmatmul.f32.gmra.mxu0 %v320
        %v1250 = vpop.f32.mrf.mxu0
        %v1251 = vadd.f32 %v1138, %v1250
        %1252 = vmatmul.f32.gmra.mxu0 %v324
        %v1253 = vpop.f32.mrf.mxu0
        %v1254 = vadd.f32 %v1141, %v1253
        %1255 = vmatmul.f32.gmra.mxu0 %v328
        %v1256 = vpop.f32.mrf.mxu0
        %v1257 = vadd.f32 %v1144, %v1256
        %1258 = vmatmul.f32.gmra.mxu0 %v332
        %v1259 = vpop.f32.mrf.mxu0
        %v1260 = vadd.f32 %v1147, %v1259
        %1261 = vmatmul.f32.gmra.mxu0 %v336
        %v1262 = vpop.f32.mrf.mxu0
        %v1263 = vadd.f32 %v1150, %v1262
        %1264 = vmatmul.f32.gmra.mxu0 %v340
        %v1265 = vpop.f32.mrf.mxu0
        %v1266 = vadd.f32 %v1153, %v1265
        %1267 = vmatmul.f32.gmra.mxu0 %v344
        %v1268 = vpop.f32.mrf.mxu0
        %v1269 = vadd.f32 %v1156, %v1268
        %1270 = vmatmul.f32.gmra.mxu0 %v348
        %v1271 = vpop.f32.mrf.mxu0
        %v1272 = vadd.f32 %v1159, %v1271
        %1273 = vmatmul.f32.gmra.mxu0 %v352
        %v1274 = vpop.f32.mrf.mxu0
        %v1275 = vadd.f32 %v1162, %v1274
        %1276 = vmatmul.f32.gmra.mxu0 %v356
        %v1277 = vpop.f32.mrf.mxu0
        %v1278 = vadd.f32 %v1165, %v1277
        %1279 = vmatmul.f32.gmra.mxu0 %v360
        %v1280 = vpop.f32.mrf.mxu0
        %v1281 = vadd.f32 %v1168, %v1280
        %1282 = vmatmul.f32.gmra.mxu0 %v364
        %v1283 = vpop.f32.mrf.mxu0
        %v1284 = vadd.f32 %v1171, %v1283
        %1285 = vmatmul.f32.gmra.mxu0 %v368
        %v1286 = vpop.f32.mrf.mxu0
        %v1287 = vadd.f32 %v1174, %v1286
        %1288 = vdwg.mxu0
        %1289 = vmatpush.msra.mxu0 %v497
        %1290 = vmatpush.msra.mxu0 %v495
        %1291 = vmatpush.msra.mxu0 %v493
        %1292 = vmatpush.msra.mxu0 %v491
        %1293 = vmatpush.msra.mxu0 %v489
        %1294 = vmatpush.msra.mxu0 %v487
        %1295 = vmatpush.msra.mxu0 %v485
        %1296 = vmatpush.msra.mxu0 %v483
        %1297 = vmatpush.msra.mxu0 %v481
        %1298 = vmatpush.msra.mxu0 %v479
        %1299 = vmatpush.msra.mxu0 %v477
        %1300 = vmatpush.msra.mxu0 %v475
        %1301 = vmatpush.msra.mxu0 %v473
        %1302 = vmatpush.msra.mxu0 %v471
        %1303 = vmatpush.msra.mxu0 %v469
        %1304 = vmatpush.msra.mxu0 %v467
        %1305 = vmatmul.f32.gmra.mxu0 %v245
        %v1306 = vpop.f32.mrf.mxu0
        %v1307 = vadd.f32 %v1194, %v1306
        %1308 = vmatmul.f32.gmra.mxu0 %v249
        %v1309 = vpop.f32.mrf.mxu0
        %v1310 = vadd.f32 %v1197, %v1309
        %1311 = vmatmul.f32.gmra.mxu0 %v253
        %v1312 = vpop.f32.mrf.mxu0
        %v1313 = vadd.f32 %v1200, %v1312
        %1314 = vmatmul.f32.gmra.mxu0 %v257
        %v1315 = vpop.f32.mrf.mxu0
        %v1316 = vadd.f32 %v1203, %v1315
        %1317 = vmatmul.f32.gmra.mxu0 %v261
        %v1318 = vpop.f32.mrf.mxu0
        %v1319 = vadd.f32 %v1206, %v1318
        %1320 = vmatmul.f32.gmra.mxu0 %v265
        %v1321 = vpop.f32.mrf.mxu0
        %v1322 = vadd.f32 %v1209, %v1321
        %1323 = vmatmul.f32.gmra.mxu0 %v269
        %v1324 = vpop.f32.mrf.mxu0
        %v1325 = vadd.f32 %v1212, %v1324
        %1326 = vmatmul.f32.gmra.mxu0 %v273
        %v1327 = vpop.f32.mrf.mxu0
        %v1328 = vadd.f32 %v1215, %v1327
        %1329 = vmatmul.f32.gmra.mxu0 %v277
        %v1330 = vpop.f32.mrf.mxu0
        %v1331 = vadd.f32 %v1218, %v1330
        %1332 = vmatmul.f32.gmra.mxu0 %v281
        %v1333 = vpop.f32.mrf.mxu0
        %v1334 = vadd.f32 %v1221, %v1333
        %1335 = vmatmul.f32.gmra.mxu0 %v285
        %v1336 = vpop.f32.mrf.mxu0
        %v1337 = vadd.f32 %v1224, %v1336
        %1338 = vmatmul.f32.gmra.mxu0 %v289
        %v1339 = vpop.f32.mrf.mxu0
        %v1340 = vadd.f32 %v1227, %v1339
        %1341 = vmatmul.f32.gmra.mxu0 %v293
        %v1342 = vpop.f32.mrf.mxu0
        %v1343 = vadd.f32 %v1230, %v1342
        %1344 = vmatmul.f32.gmra.mxu0 %v297
        %v1345 = vpop.f32.mrf.mxu0
        %v1346 = vadd.f32 %v1233, %v1345
        %1347 = vmatmul.f32.gmra.mxu0 %v301
        %v1348 = vpop.f32.mrf.mxu0
        %v1349 = vadd.f32 %v1236, %v1348
        %1350 = vmatmul.f32.gmra.mxu0 %v305
        %v1351 = vpop.f32.mrf.mxu0
        %v1352 = vadd.f32 %v1239, %v1351
        %1353 = vmatmul.f32.gmra.mxu0 %v309
        %v1354 = vpop.f32.mrf.mxu0
        %v1355 = vadd.f32 %v1242, %v1354
        %1356 = vmatmul.f32.gmra.mxu0 %v313
        %v1357 = vpop.f32.mrf.mxu0
        %v1358 = vadd.f32 %v1245, %v1357
        %1359 = vmatmul.f32.gmra.mxu0 %v317
        %v1360 = vpop.f32.mrf.mxu0
        %v1361 = vadd.f32 %v1248, %v1360
        %1362 = vmatmul.f32.gmra.mxu0 %v321
        %v1363 = vpop.f32.mrf.mxu0
        %v1364 = vadd.f32 %v1251, %v1363
        %1365 = vmatmul.f32.gmra.mxu0 %v325
        %v1366 = vpop.f32.mrf.mxu0
        %v1367 = vadd.f32 %v1254, %v1366
        %1368 = vmatmul.f32.gmra.mxu0 %v329
        %v1369 = vpop.f32.mrf.mxu0
        %v1370 = vadd.f32 %v1257, %v1369
        %1371 = vmatmul.f32.gmra.mxu0 %v333
        %v1372 = vpop.f32.mrf.mxu0
        %v1373 = vadd.f32 %v1260, %v1372
        %1374 = vmatmul.f32.gmra.mxu0 %v337
        %v1375 = vpop.f32.mrf.mxu0
        %v1376 = vadd.f32 %v1263, %v1375
        %1377 = vmatmul.f32.gmra.mxu0 %v341
        %v1378 = vpop.f32.mrf.mxu0
        %v1379 = vadd.f32 %v1266, %v1378
        %1380 = vmatmul.f32.gmra.mxu0 %v345
        %v1381 = vpop.f32.mrf.mxu0
        %v1382 = vadd.f32 %v1269, %v1381
        %1383 = vmatmul.f32.gmra.mxu0 %v349
        %v1384 = vpop.f32.mrf.mxu0
        %v1385 = vadd.f32 %v1272, %v1384
        %1386 = vmatmul.f32.gmra.mxu0 %v353
        %v1387 = vpop.f32.mrf.mxu0
        %v1388 = vadd.f32 %v1275, %v1387
        %1389 = vmatmul.f32.gmra.mxu0 %v357
        %v1390 = vpop.f32.mrf.mxu0
        %v1391 = vadd.f32 %v1278, %v1390
        %1392 = vmatmul.f32.gmra.mxu0 %v361
        %v1393 = vpop.f32.mrf.mxu0
        %v1394 = vadd.f32 %v1281, %v1393
        %1395 = vmatmul.f32.gmra.mxu0 %v365
        %v1396 = vpop.f32.mrf.mxu0
        %v1397 = vadd.f32 %v1284, %v1396
        %1398 = vmatmul.f32.gmra.mxu0 %v369
        %v1399 = vpop.f32.mrf.mxu0
        %v1400 = vadd.f32 %v1287, %v1399
        %1401 = vdwg.mxu0
        %p1402 = scmp.eq.s32.totalorder %s27, 0
        // Predicated region
        $region37: #{tpu_custom_call.1} parent=27 // pred_check
          %p1403 = pneg %p1402
        $region38: #{tpu_custom_call.1} parent=27 // pred_check_branch
          %1405 = sbr.rel (%p1403) target = $region40
        $region39: #{tpu_custom_call.1} parent=27 // pred_region
          %1406 = vst [vmem:[%s227] sm:$0xff] %v855
          %1407 = vst [vmem:[%s227 + $0x8] sm:$0xff] %v1307
          %1408 = vst [vmem:[%s227 + $0x10] sm:$0xff] %v858
          %1409 = vst [vmem:[%s227 + $0x18] sm:$0xff] %v1310
          %1410 = vst [vmem:[%s227 + $0x20] sm:$0xff] %v861
          %1411 = vst [vmem:[%s227 + $0x28] sm:$0xff] %v1313
          %1412 = vst [vmem:[%s227 + $0x30] sm:$0xff] %v864
          %1413 = vst [vmem:[%s227 + $0x38] sm:$0xff] %v1316
          %1414 = vst [vmem:[%s227 + $0x40] sm:$0xff] %v867
          %1415 = vst [vmem:[%s227 + $0x48] sm:$0xff] %v1319
          %1416 = vst [vmem:[%s227 + $0x50] sm:$0xff] %v870
          %1417 = vst [vmem:[%s227 + $0x58] sm:$0xff] %v1322
          %1418 = vst [vmem:[%s227 + $0x60] sm:$0xff] %v873
          %1419 = vst [vmem:[%s227 + $0x68] sm:$0xff] %v1325
          %1420 = vst [vmem:[%s227 + $0x70] sm:$0xff] %v876
          %1421 = vst [vmem:[%s227 + $0x78] sm:$0xff] %v1328
          %1422 = vst [vmem:[%s227 + $0x80] sm:$0xff] %v879
          %1423 = vst [vmem:[%s227 + $0x88] sm:$0xff] %v1331
          %1424 = vst [vmem:[%s227 + $0x90] sm:$0xff] %v882
          %1425 = vst [vmem:[%s227 + $0x98] sm:$0xff] %v1334
          %1426 = vst [vmem:[%s227 + $0xa0] sm:$0xff] %v885
          %1427 = vst [vmem:[%s227 + $0xa8] sm:$0xff] %v1337
          %1428 = vst [vmem:[%s227 + $0xb0] sm:$0xff] %v888
          %1429 = vst [vmem:[%s227 + $0xb8] sm:$0xff] %v1340
          %1430 = vst [vmem:[%s227 + $0xc0] sm:$0xff] %v891
          %1431 = vst [vmem:[%s227 + $0xc8] sm:$0xff] %v1343
          %1432 = vst [vmem:[%s227 + $0xd0] sm:$0xff] %v894
          %1433 = vst [vmem:[%s227 + $0xd8] sm:$0xff] %v1346
          %1434 = vst [vmem:[%s227 + $0xe0] sm:$0xff] %v897
          %1435 = vst [vmem:[%s227 + $0xe8] sm:$0xff] %v1349
          %1436 = vst [vmem:[%s227 + $0xf0] sm:$0xff] %v900
          %1437 = vst [vmem:[%s227 + $0xf8] sm:$0xff] %v1352
          %1438 = vst [vmem:[%s227 + $0x100] sm:$0xff] %v903
          %1439 = vst [vmem:[%s227 + $0x108] sm:$0xff] %v1355
          %1440 = vst [vmem:[%s227 + $0x110] sm:$0xff] %v906
          %1441 = vst [vmem:[%s227 + $0x118] sm:$0xff] %v1358
          %1442 = vst [vmem:[%s227 + $0x120] sm:$0xff] %v909
          %1443 = vst [vmem:[%s227 + $0x128] sm:$0xff] %v1361
          %1444 = vst [vmem:[%s227 + $0x130] sm:$0xff] %v912
          %1445 = vst [vmem:[%s227 + $0x138] sm:$0xff] %v1364
          %1446 = vst [vmem:[%s227 + $0x140] sm:$0xff] %v915
          %1447 = vst [vmem:[%s227 + $0x148] sm:$0xff] %v1367
          %1448 = vst [vmem:[%s227 + $0x150] sm:$0xff] %v918
          %1449 = vst [vmem:[%s227 + $0x158] sm:$0xff] %v1370
          %1450 = vst [vmem:[%s227 + $0x160] sm:$0xff] %v921
          %1451 = vst [vmem:[%s227 + $0x168] sm:$0xff] %v1373
          %1452 = vst [vmem:[%s227 + $0x170] sm:$0xff] %v924
          %1453 = vst [vmem:[%s227 + $0x178] sm:$0xff] %v1376
          %1454 = vst [vmem:[%s227 + $0x180] sm:$0xff] %v927
          %1455 = vst [vmem:[%s227 + $0x188] sm:$0xff] %v1379
          %1456 = vst [vmem:[%s227 + $0x190] sm:$0xff] %v930
          %1457 = vst [vmem:[%s227 + $0x198] sm:$0xff] %v1382
          %1458 = vst [vmem:[%s227 + $0x1a0] sm:$0xff] %v933
          %1459 = vst [vmem:[%s227 + $0x1a8] sm:$0xff] %v1385
          %1460 = vst [vmem:[%s227 + $0x1b0] sm:$0xff] %v936
          %1461 = vst [vmem:[%s227 + $0x1b8] sm:$0xff] %v1388
          %1462 = vst [vmem:[%s227 + $0x1c0] sm:$0xff] %v939
          %1463 = vst [vmem:[%s227 + $0x1c8] sm:$0xff] %v1391
          %1464 = vst [vmem:[%s227 + $0x1d0] sm:$0xff] %v942
          %1465 = vst [vmem:[%s227 + $0x1d8] sm:$0xff] %v1394
          %1466 = vst [vmem:[%s227 + $0x1e0] sm:$0xff] %v945
          %1467 = vst [vmem:[%s227 + $0x1e8] sm:$0xff] %v1397
          %1468 = vst [vmem:[%s227 + $0x1f0] sm:$0xff] %v948
          %1469 = vst [vmem:[%s227 + $0x1f8] sm:$0xff] %v1400
        $region40: #{tpu_custom_call.1} parent=27 // pred_fallthru
          _
        %p1470 = scmp.ne.s32.totalorder %s27, 0
        // Predicated region
        $region41: #{tpu_custom_call.1} parent=27 // pred_check
          %p1471 = pneg %p1470
        $region42: #{tpu_custom_call.1} parent=27 // pred_check_branch
          %1473 = sbr.rel (%p1471) target = $region44
        $region43: #{tpu_custom_call.1} parent=27 // pred_region
          %v1474 = vld [vmem:[%s227] sm:$0xff]
          %v1475 = vld [vmem:[%s227 + $0x8] sm:$0xff]
          %v1476 = vld [vmem:[%s227 + $0x10] sm:$0xff]
          %v1477 = vld [vmem:[%s227 + $0x18] sm:$0xff]
          %v1478 = vld [vmem:[%s227 + $0x20] sm:$0xff]
          %v1479 = vld [vmem:[%s227 + $0x28] sm:$0xff]
          %v1480 = vld [vmem:[%s227 + $0x30] sm:$0xff]
          %v1481 = vld [vmem:[%s227 + $0x38] sm:$0xff]
          %v1482 = vld [vmem:[%s227 + $0x40] sm:$0xff]
          %v1483 = vld [vmem:[%s227 + $0x48] sm:$0xff]
          %v1484 = vld [vmem:[%s227 + $0x50] sm:$0xff]
          %v1485 = vld [vmem:[%s227 + $0x58] sm:$0xff]
          %v1486 = vld [vmem:[%s227 + $0x60] sm:$0xff]
          %v1487 = vld [vmem:[%s227 + $0x68] sm:$0xff]
          %v1488 = vld [vmem:[%s227 + $0x70] sm:$0xff]
          %v1489 = vld [vmem:[%s227 + $0x78] sm:$0xff]
          %v1490 = vld [vmem:[%s227 + $0x80] sm:$0xff]
          %v1491 = vld [vmem:[%s227 + $0x88] sm:$0xff]
          %v1492 = vld [vmem:[%s227 + $0x90] sm:$0xff]
          %v1493 = vld [vmem:[%s227 + $0x98] sm:$0xff]
          %v1494 = vld [vmem:[%s227 + $0xa0] sm:$0xff]
          %v1495 = vld [vmem:[%s227 + $0xa8] sm:$0xff]
          %v1496 = vld [vmem:[%s227 + $0xb0] sm:$0xff]
          %v1497 = vld [vmem:[%s227 + $0xb8] sm:$0xff]
          %v1498 = vld [vmem:[%s227 + $0xc0] sm:$0xff]
          %v1499 = vld [vmem:[%s227 + $0xc8] sm:$0xff]
          %v1500 = vld [vmem:[%s227 + $0xd0] sm:$0xff]
          %v1501 = vld [vmem:[%s227 + $0xd8] sm:$0xff]
          %v1502 = vld [vmem:[%s227 + $0xe0] sm:$0xff]
          %v1503 = vld [vmem:[%s227 + $0xe8] sm:$0xff]
          %v1504 = vld [vmem:[%s227 + $0xf0] sm:$0xff]
          %v1505 = vld [vmem:[%s227 + $0xf8] sm:$0xff]
          %v1506 = vld [vmem:[%s227 + $0x100] sm:$0xff]
          %v1507 = vld [vmem:[%s227 + $0x108] sm:$0xff]
          %v1508 = vld [vmem:[%s227 + $0x110] sm:$0xff]
          %v1509 = vld [vmem:[%s227 + $0x118] sm:$0xff]
          %v1510 = vld [vmem:[%s227 + $0x120] sm:$0xff]
          %v1511 = vld [vmem:[%s227 + $0x128] sm:$0xff]
          %v1512 = vld [vmem:[%s227 + $0x130] sm:$0xff]
          %v1513 = vld [vmem:[%s227 + $0x138] sm:$0xff]
          %v1514 = vld [vmem:[%s227 + $0x140] sm:$0xff]
          %v1515 = vld [vmem:[%s227 + $0x148] sm:$0xff]
          %v1516 = vld [vmem:[%s227 + $0x150] sm:$0xff]
          %v1517 = vld [vmem:[%s227 + $0x158] sm:$0xff]
          %v1518 = vld [vmem:[%s227 + $0x160] sm:$0xff]
          %v1519 = vld [vmem:[%s227 + $0x168] sm:$0xff]
          %v1520 = vld [vmem:[%s227 + $0x170] sm:$0xff]
          %v1521 = vld [vmem:[%s227 + $0x178] sm:$0xff]
          %v1522 = vld [vmem:[%s227 + $0x180] sm:$0xff]
          %v1523 = vld [vmem:[%s227 + $0x188] sm:$0xff]
          %v1524 = vld [vmem:[%s227 + $0x190] sm:$0xff]
          %v1525 = vld [vmem:[%s227 + $0x198] sm:$0xff]
          %v1526 = vld [vmem:[%s227 + $0x1a0] sm:$0xff]
          %v1527 = vld [vmem:[%s227 + $0x1a8] sm:$0xff]
          %v1528 = vld [vmem:[%s227 + $0x1b0] sm:$0xff]
          %v1529 = vld [vmem:[%s227 + $0x1b8] sm:$0xff]
          %v1530 = vld [vmem:[%s227 + $0x1c0] sm:$0xff]
          %v1531 = vld [vmem:[%s227 + $0x1c8] sm:$0xff]
          %v1532 = vld [vmem:[%s227 + $0x1d0] sm:$0xff]
          %v1533 = vld [vmem:[%s227 + $0x1d8] sm:$0xff]
          %v1534 = vld [vmem:[%s227 + $0x1e0] sm:$0xff]
          %v1535 = vld [vmem:[%s227 + $0x1e8] sm:$0xff]
          %v1536 = vld [vmem:[%s227 + $0x1f0] sm:$0xff]
          %v1537 = vld [vmem:[%s227 + $0x1f8] sm:$0xff]
          %v1538 = vadd.f32 %v1474, %v855
          %v1539 = vadd.f32 %v1475, %v1307
          %v1540 = vadd.f32 %v1476, %v858
          %v1541 = vadd.f32 %v1477, %v1310
          %v1542 = vadd.f32 %v1478, %v861
          %v1543 = vadd.f32 %v1479, %v1313
          %v1544 = vadd.f32 %v1480, %v864
          %v1545 = vadd.f32 %v1481, %v1316
          %v1546 = vadd.f32 %v1482, %v867
          %v1547 = vadd.f32 %v1483, %v1319
          %v1548 = vadd.f32 %v1484, %v870
          %v1549 = vadd.f32 %v1485, %v1322
          %v1550 = vadd.f32 %v1486, %v873
          %v1551 = vadd.f32 %v1487, %v1325
          %v1552 = vadd.f32 %v1488, %v876
          %v1553 = vadd.f32 %v1489, %v1328
          %v1554 = vadd.f32 %v1490, %v879
          %v1555 = vadd.f32 %v1491, %v1331
          %v1556 = vadd.f32 %v1492, %v882
          %v1557 = vadd.f32 %v1493, %v1334
          %v1558 = vadd.f32 %v1494, %v885
          %v1559 = vadd.f32 %v1495, %v1337
          %v1560 = vadd.f32 %v1496, %v888
          %v1561 = vadd.f32 %v1497, %v1340
          %v1562 = vadd.f32 %v1498, %v891
          %v1563 = vadd.f32 %v1499, %v1343
          %v1564 = vadd.f32 %v1500, %v894
          %v1565 = vadd.f32 %v1501, %v1346
          %v1566 = vadd.f32 %v1502, %v897
          %v1567 = vadd.f32 %v1503, %v1349
          %v1568 = vadd.f32 %v1504, %v900
          %v1569 = vadd.f32 %v1505, %v1352
          %v1570 = vadd.f32 %v1506, %v903
          %v1571 = vadd.f32 %v1507, %v1355
          %v1572 = vadd.f32 %v1508, %v906
          %v1573 = vadd.f32 %v1509, %v1358
          %v1574 = vadd.f32 %v1510, %v909
          %v1575 = vadd.f32 %v1511, %v1361
          %v1576 = vadd.f32 %v1512, %v912
          %v1577 = vadd.f32 %v1513, %v1364
          %v1578 = vadd.f32 %v1514, %v915
          %v1579 = vadd.f32 %v1515, %v1367
          %v1580 = vadd.f32 %v1516, %v918
          %v1581 = vadd.f32 %v1517, %v1370
          %v1582 = vadd.f32 %v1518, %v921
          %v1583 = vadd.f32 %v1519, %v1373
          %v1584 = vadd.f32 %v1520, %v924
          %v1585 = vadd.f32 %v1521, %v1376
          %v1586 = vadd.f32 %v1522, %v927
          %v1587 = vadd.f32 %v1523, %v1379
          %v1588 = vadd.f32 %v1524, %v930
          %v1589 = vadd.f32 %v1525, %v1382
          %v1590 = vadd.f32 %v1526, %v933
          %v1591 = vadd.f32 %v1527, %v1385
          %v1592 = vadd.f32 %v1528, %v936
          %v1593 = vadd.f32 %v1529, %v1388
          %v1594 = vadd.f32 %v1530, %v939
          %v1595 = vadd.f32 %v1531, %v1391
          %v1596 = vadd.f32 %v1532, %v942
          %v1597 = vadd.f32 %v1533, %v1394
          %v1598 = vadd.f32 %v1534, %v945
          %v1599 = vadd.f32 %v1535, %v1397
          %v1600 = vadd.f32 %v1536, %v948
          %v1601 = vadd.f32 %v1537, %v1400
          %1602 = vst [vmem:[%s227] sm:$0xff] %v1538
          %1603 = vst [vmem:[%s227 + $0x8] sm:$0xff] %v1539
          %1604 = vst [vmem:[%s227 + $0x10] sm:$0xff] %v1540
          %1605 = vst [vmem:[%s227 + $0x18] sm:$0xff] %v1541
          %1606 = vst [vmem:[%s227 + $0x20] sm:$0xff] %v1542
          %1607 = vst [vmem:[%s227 + $0x28] sm:$0xff] %v1543
          %1608 = vst [vmem:[%s227 + $0x30] sm:$0xff] %v1544
          %1609 = vst [vmem:[%s227 + $0x38] sm:$0xff] %v1545
          %1610 = vst [vmem:[%s227 + $0x40] sm:$0xff] %v1546
          %1611 = vst [vmem:[%s227 + $0x48] sm:$0xff] %v1547
          %1612 = vst [vmem:[%s227 + $0x50] sm:$0xff] %v1548
          %1613 = vst [vmem:[%s227 + $0x58] sm:$0xff] %v1549
          %1614 = vst [vmem:[%s227 + $0x60] sm:$0xff] %v1550
          %1615 = vst [vmem:[%s227 + $0x68] sm:$0xff] %v1551
          %1616 = vst [vmem:[%s227 + $0x70] sm:$0xff] %v1552
          %1617 = vst [vmem:[%s227 + $0x78] sm:$0xff] %v1553
          %1618 = vst [vmem:[%s227 + $0x80] sm:$0xff] %v1554
          %1619 = vst [vmem:[%s227 + $0x88] sm:$0xff] %v1555
          %1620 = vst [vmem:[%s227 + $0x90] sm:$0xff] %v1556
          %1621 = vst [vmem:[%s227 + $0x98] sm:$0xff] %v1557
          %1622 = vst [vmem:[%s227 + $0xa0] sm:$0xff] %v1558
          %1623 = vst [vmem:[%s227 + $0xa8] sm:$0xff] %v1559
          %1624 = vst [vmem:[%s227 + $0xb0] sm:$0xff] %v1560
          %1625 = vst [vmem:[%s227 + $0xb8] sm:$0xff] %v1561
          %1626 = vst [vmem:[%s227 + $0xc0] sm:$0xff] %v1562
          %1627 = vst [vmem:[%s227 + $0xc8] sm:$0xff] %v1563
          %1628 = vst [vmem:[%s227 + $0xd0] sm:$0xff] %v1564
          %1629 = vst [vmem:[%s227 + $0xd8] sm:$0xff] %v1565
          %1630 = vst [vmem:[%s227 + $0xe0] sm:$0xff] %v1566
          %1631 = vst [vmem:[%s227 + $0xe8] sm:$0xff] %v1567
          %1632 = vst [vmem:[%s227 + $0xf0] sm:$0xff] %v1568
          %1633 = vst [vmem:[%s227 + $0xf8] sm:$0xff] %v1569
          %1634 = vst [vmem:[%s227 + $0x100] sm:$0xff] %v1570
          %1635 = vst [vmem:[%s227 + $0x108] sm:$0xff] %v1571
          %1636 = vst [vmem:[%s227 + $0x110] sm:$0xff] %v1572
          %1637 = vst [vmem:[%s227 + $0x118] sm:$0xff] %v1573
          %1638 = vst [vmem:[%s227 + $0x120] sm:$0xff] %v1574
          %1639 = vst [vmem:[%s227 + $0x128] sm:$0xff] %v1575
          %1640 = vst [vmem:[%s227 + $0x130] sm:$0xff] %v1576
          %1641 = vst [vmem:[%s227 + $0x138] sm:$0xff] %v1577
          %1642 = vst [vmem:[%s227 + $0x140] sm:$0xff] %v1578
          %1643 = vst [vmem:[%s227 + $0x148] sm:$0xff] %v1579
          %1644 = vst [vmem:[%s227 + $0x150] sm:$0xff] %v1580
          %1645 = vst [vmem:[%s227 + $0x158] sm:$0xff] %v1581
          %1646 = vst [vmem:[%s227 + $0x160] sm:$0xff] %v1582
          %1647 = vst [vmem:[%s227 + $0x168] sm:$0xff] %v1583
          %1648 = vst [vmem:[%s227 + $0x170] sm:$0xff] %v1584
          %1649 = vst [vmem:[%s227 + $0x178] sm:$0xff] %v1585
          %1650 = vst [vmem:[%s227 + $0x180] sm:$0xff] %v1586
          %1651 = vst [vmem:[%s227 + $0x188] sm:$0xff] %v1587
          %1652 = vst [vmem:[%s227 + $0x190] sm:$0xff] %v1588
          %1653 = vst [vmem:[%s227 + $0x198] sm:$0xff] %v1589
          %1654 = vst [vmem:[%s227 + $0x1a0] sm:$0xff] %v1590
          %1655 = vst [vmem:[%s227 + $0x1a8] sm:$0xff] %v1591
          %1656 = vst [vmem:[%s227 + $0x1b0] sm:$0xff] %v1592
          %1657 = vst [vmem:[%s227 + $0x1b8] sm:$0xff] %v1593
          %1658 = vst [vmem:[%s227 + $0x1c0] sm:$0xff] %v1594
          %1659 = vst [vmem:[%s227 + $0x1c8] sm:$0xff] %v1595
          %1660 = vst [vmem:[%s227 + $0x1d0] sm:$0xff] %v1596
          %1661 = vst [vmem:[%s227 + $0x1d8] sm:$0xff] %v1597
          %1662 = vst [vmem:[%s227 + $0x1e0] sm:$0xff] %v1598
          %1663 = vst [vmem:[%s227 + $0x1e8] sm:$0xff] %v1599
          %1664 = vst [vmem:[%s227 + $0x1f0] sm:$0xff] %v1600
          %1665 = vst [vmem:[%s227 + $0x1f8] sm:$0xff] %v1601
        $region44: #{tpu_custom_call.1} parent=27 // pred_fallthru
          _
        %s1666 = sand.u32 %s105, 1
        %s1667 = scalar_lea.sflag [#allocation4], %s1666
        %s1668 = sand.u32 %s105, 1
        %s1669 = smul.addr %s1668, 512
        %s1670 = scalar_lea.vmem [#allocation7], %s1669
        // Predicated region
        $region45: #{tpu_custom_call.1} parent=27 // pred_check
          %p1671 = pneg %p115
        $region46: #{tpu_custom_call.1} parent=27 // pred_check_branch
          %1673 = sbr.rel (%p1671) target = $region48
        $region47: #{tpu_custom_call.1} parent=27 // pred_region
          %s1674 = smul.u32 32, %s25
          %s1675 = smul.u32 2, %s26
          %s1676 = ssub.s32 3, %s1675
          %p1677 = scmp.lt.s32.totalorder %s1676, 2
          %s1678 = scalar_select %p1677, %s1676, 2
          %s1679 = smul.u32 256, %s1678
          %s1680 = ssub.s32 512, %s1679
          %s1681 = sshll.u32 %s1680, 4
          %1682 = vsyncadd %s1667, %s1681
          %p1683 = scmp.ne.s32.totalorder 0, %s1679
          %s1684 = smul.addr %s1674, 3
          %s1685 = sadd.s32 %s1675, %s1684
          %s1686 = smul.addr %s1685, 8
          %s1687 = scalar_lea.hbm %s2, %s1686
          %s1688 = smul.u32 %s1678, 8
          %s1689 = smul.u32 %s1688, 32
          %s1690 = sshll.u32 %s1670, 4
          %s1691 = int_to_ptr.vmem [resolvable:$true] %s1690
          %s1692 = sshll.u32 %s1687, 4
          %s1693 = int_to_ptr.hbm [resolvable:$true] %s1692
          %s1694 = sshll.u32 %s1689, 4
          %1698 = dma.vmem_to_hbm [thread:$0]  (%p1683), %s1691, %s1694, %s1693, %s1667, 256, 384, %s1688
        $region48: #{tpu_custom_call.1} parent=27 // pred_fallthru
          _
      $region28: #{tpu_custom_call.1} parent=5 // pred_fallthru
        _
      %p1699 = scmp.le.s32.totalorder 2, %s15
      // Predicated region
      $region49: #{tpu_custom_call.1} parent=5 // pred_check
        %p1700 = pneg %p1699
      $region50: #{tpu_custom_call.1} parent=5 // pred_check_branch
        %1702 = sbr.rel (%p1700) target = $region52
      $region51: #{tpu_custom_call.1} parent=5 // pred_region
        %s1703 = ssub.s32 %s15, 2
        // Predicated region
        $region53: #{tpu_custom_call.1} parent=51 // pred_check
          %p1704 = pneg %p121
        $region54: #{tpu_custom_call.1} parent=51 // pred_check_branch
          %1706 = sbr.rel (%p1704) target = $region56
        $region55: #{tpu_custom_call.1} parent=51 // pred_region
          %s1707 = sand.u32 %s106, 1
          %s1708 = scalar_lea.sflag [#allocation4], %s1707
          %s1709 = sand.u32 %s106, 1
          %s1710 = smul.addr %s1709, 512
          %s1711 = scalar_lea.vmem [#allocation7], %s1710
          %1713 = dma.done %s1708, 8192
        $region56: #{tpu_custom_call.1} parent=51 // pred_fallthru
          _
      $region52: #{tpu_custom_call.1} parent=5 // pred_fallthru
        _
    $region6: #{tpu_custom_call.1} parent=1 // loop_footer
      %s19 = sadd.s32 1, %s15
    $region7: #{tpu_custom_call.1} parent=1 // loop_footer_branch
      %14 = sbr.rel target = $region3
    $region8: #{tpu_custom_call.1} parent=1 // loop_exit
      _
    %1714 = vsyncpa [#allocation3], 1
    %s1715 = scalar_lea.sflag [#allocation3], 1
    %1716 = vsyncpa %s1715, 1
    %1717 = vsyncpa [#allocation6], 1
    %s1718 = scalar_lea.sflag [#allocation6], 1
    %1719 = vsyncpa %s1718, 1
    %1720 = vsyncpa [#allocation4], 1
    %s1721 = scalar_lea.sflag [#allocation4], 1
    %1722 = vsyncpa %s1721, 1

</llo_original>
